<compile_context>
chip_gen: v7x
topology: tpu7x:2x2x1
jax: 0.10.0
libtpu: 0.0.40
codegen_flags: <defaults>
</compile_context>

<pallas_src>
import numpy as np
import jax
import jax.numpy as jnp
from jax import lax
from jax.experimental import pallas as pl
from jax.experimental.pallas import tpu as pltpu

POOL = 4  # nn.AvgPool2d(4)


# ----------------------------------------------------------------------------
# Kernel: MB images per grid step -> one partial sum of the four squared diffs
# ----------------------------------------------------------------------------
def _spatial_kernel(orig_ref, enh_ref, ah_ref, pw_ref,
                    su_ref, sd_ref, sl_ref, sr_ref, out_ref):
    mb, c, _, _ = orig_ref.shape
    hp = ah_ref.shape[0]
    wp = sl_ref.shape[0]
    # Load the small resident constants once for the whole step.
    ah = ah_ref[...]
    pw = pw_ref[...]
    su = su_ref[...]
    sd = sd_ref[...]
    sl = sl_ref[...]
    sr = sr_ref[...]

    esum = jnp.zeros((hp, wp), jnp.float32)
    # Static unroll over the (small) per-step image count; each image is a
    # handful of tiny MXU matmuls, so code size stays modest and the MXU work
    # scales linearly with MB (no block-diagonal zero-multiplication).
    for m in range(mb):
        # Channel-sum of the difference, built slice by slice (cast in-kernel;
        # DMA stays at input width, no (MB,C,H,W) f32 temporary).  The 1/C of
        # the channel mean is folded into pw.
        d = orig_ref[m, 0].astype(jnp.float32) - enh_ref[m, 0].astype(jnp.float32)
        for ch in range(1, c):
            d = d + (orig_ref[m, ch].astype(jnp.float32)
                     - enh_ref[m, ch].astype(jnp.float32))
        # 4x4 average pool (and /C): d (H, W) -> p (Hp, Wp) via two MXU matmuls.
        t = jnp.dot(d, pw, preferred_element_type=jnp.float32)    # (H, Wp)
        p = jnp.dot(ah, t, preferred_element_type=jnp.float32)    # (Hp, Wp)
        # Zero-padded neighbour maps == the lf/rt/up/dn 3x3 difference convs.
        up = jnp.dot(su, p, preferred_element_type=jnp.float32)
        dn = jnp.dot(sd, p, preferred_element_type=jnp.float32)
        lf = jnp.dot(p, sl, preferred_element_type=jnp.float32)
        rt = jnp.dot(p, sr, preferred_element_type=jnp.float32)
        esum = esum + ((p - lf) ** 2 + (p - rt) ** 2
                       + (p - up) ** 2 + (p - dn) ** 2)
    # Lane-dense partial-sum store (one row of 128 lanes per grid step).
    out_ref[...] = jnp.full((1, 1, 128), jnp.sum(esum), dtype=jnp.float32)


# ----------------------------------------------------------------------------
# Generation-aware tiling choices
# ----------------------------------------------------------------------------
def _tpu_generation_params():
    """(target bytes per streamed input block, vmem_limit_bytes, need >= 2 grid steps)."""
    vmem_cap = 0
    try:
        info = pltpu.get_tpu_info()
        vmem_cap = int(getattr(info, "vmem_capacity_bytes", 0) or 0)
    except Exception:
        vmem_cap = 0
    if vmem_cap >= 100 * 1024 * 1024:
        # v5e / v6e class: 128 MiB physical VMEM, single TensorCore per chip.
        return 4 * 1024 * 1024, 64 * 1024 * 1024, False
    # v7x class (64 MiB VMEM, 2 TensorCores per chip) or unknown backend:
    # smaller blocks, conservative scoped limit, and keep >= 2 grid steps.
    return 2 * 1024 * 1024, 32 * 1024 * 1024, True


def _choose_images_per_step(batch, per_image_bytes, target_bytes, need_two_steps,
                            max_mb=16):
    """Images per grid step.

    `target_bytes` bounds ONE streamed input block; the total per-step VMEM
    footprint is ~4x that (2 inputs x 2 pipeline buffers) plus an (MB,H,W) f32
    intermediate and the O(Hp^2+Wp^2) constants, which stays well under the
    scoped limits chosen in _tpu_generation_params.
    """
    cap = int(max(1, min(max_mb, target_bytes // max(int(per_image_bytes), 1))))
    if need_two_steps and batch >= 2:
        cap = max(1, min(cap, batch // 2))  # keep >= 2 grid steps so both v7x TCs get work
    mb = 1
    for k in range(1, min(cap, batch) + 1):
        if batch % k == 0:
            mb = k
    return mb


# ----------------------------------------------------------------------------
# Wrapper
# ----------------------------------------------------------------------------
def spatial_consistency_loss(original, enhanced):
    """Forward pass of SpatialConsistencyLoss: (B,C,H,W), (B,C,H,W) -> scalar."""
    assert original.shape == enhanced.shape
    b, c, h, w = original.shape
    assert h % POOL == 0 and w % POOL == 0, "H and W must be divisible by 4 (AvgPool2d(4))"
    hp, wp = h // POOL, w // POOL

    target_bytes, vmem_limit, need_two_steps = _tpu_generation_params()
    per_image_bytes = c * h * w * jnp.dtype(original.dtype).itemsize
    mb = _choose_images_per_step(b, per_image_bytes, target_bytes, need_two_steps)
    nblk = b // mb

    # Host-built per-image constants (constant index_map -> fetched once,
    # resident in VMEM).  Row-pool puts 1/4 on each row of a 4-row block;
    # column-pool folds in the channel mean's 1/C (1/(4*C) per column of a
    # 4-col block).
    ah = np.kron(np.eye(hp, dtype=np.float32),
                 np.ones((1, POOL), np.float32)) / POOL                  # (Hp, H)
    pw = np.kron(np.eye(wp, dtype=np.float32),
                 np.ones((POOL, 1), np.float32)) / (POOL * c)            # (W, Wp)
    su = np.eye(hp, k=-1, dtype=np.float32)   # up neighbour    (zero pad row 0)
    sd = np.eye(hp, k=1, dtype=np.float32)    # down neighbour  (zero pad last row)
    sl = np.eye(wp, k=1, dtype=np.float32)    # left neighbour  (zero pad col 0)
    sr = np.eye(wp, k=-1, dtype=np.float32)   # right neighbour (zero pad last col)

    partial = pl.pallas_call(
        _spatial_kernel,
        out_shape=jax.ShapeDtypeStruct((nblk, 1, 128), jnp.float32),
        grid_spec=pltpu.PrefetchScalarGridSpec(
            num_scalar_prefetch=0,
            grid=(nblk,),
            in_specs=[
                pl.BlockSpec((mb, c, h, w), lambda i: (i, 0, 0, 0)),
                pl.BlockSpec((mb, c, h, w), lambda i: (i, 0, 0, 0)),
                pl.BlockSpec((hp, h), lambda i: (0, 0)),
                pl.BlockSpec((w, wp), lambda i: (0, 0)),
                pl.BlockSpec((hp, hp), lambda i: (0, 0)),
                pl.BlockSpec((hp, hp), lambda i: (0, 0)),
                pl.BlockSpec((wp, wp), lambda i: (0, 0)),
                pl.BlockSpec((wp, wp), lambda i: (0, 0)),
            ],
            out_specs=pl.BlockSpec((1, 1, 128), lambda i: (i, 0, 0)),
        ),
        compiler_params=pltpu.CompilerParams(
            dimension_semantics=("parallel",),
            vmem_limit_bytes=vmem_limit,
        ),
    )(original, enhanced, jnp.asarray(ah), jnp.asarray(pw),
      jnp.asarray(su), jnp.asarray(sd), jnp.asarray(sl), jnp.asarray(sr))

    # E.mean() over the (B, 1, Hp, Wp) map of summed squared direction diffs.
    return jnp.sum(partial[:, 0, 0]) / jnp.float32(b * hp * wp)


# ----------------------------------------------------------------------------
# Pure-JAX reference (mirrors the PyTorch module) for validation
# ----------------------------------------------------------------------------
def _ref_spatial_consistency_loss(original, enhanced):
    om = jnp.mean(original.astype(jnp.float32), axis=1, keepdims=True)
    em = jnp.mean(enhanced.astype(jnp.float32), axis=1, keepdims=True)

    def pool(x):
        bb, cc, hh, ww = x.shape
        return x.reshape(bb, cc, hh // POOL, POOL, ww // POOL, POOL).mean(axis=(3, 5))

    op, ep = pool(om), pool(em)
    kernels = [
        jnp.array([[0, 0, 0], [-1, 1, 0], [0, 0, 0]], jnp.float32),
        jnp.array([[0, 0, 0], [0, 1, -1], [0, 0, 0]], jnp.float32),
        jnp.array([[0, -1, 0], [0, 1, 0], [0, 0, 0]], jnp.float32),
        jnp.array([[0, 0, 0], [0, 1, 0], [0, -1, 0]], jnp.float32),
    ]

    def conv(x, k):
        return lax.conv_general_dilated(
            x, k.reshape(1, 1, 3, 3), (1, 1), ((1, 1), (1, 1)),
            dimension_numbers=("NCHW", "OIHW", "NCHW"))

    e = 0.0
    for k in kernels:
        e = e + (conv(op, k) - conv(ep, k)) ** 2
    return jnp.mean(e)


# ----------------------------------------------------------------------------
if __name__ == "__main__":
    key = jax.random.PRNGKey(0)
    k1, k2, k3, k4 = jax.random.split(key, 4)

    # f32 path
    B, C, H, W = 4, 3, 16, 16
    original = jax.random.uniform(k1, (B, C, H, W), jnp.float32)
    enhanced = jax.random.uniform(k2, (B, C, H, W), jnp.float32)
    loss = jax.block_until_ready(jax.jit(spatial_consistency_loss)(original, enhanced))
    ref = jax.block_until_ready(_ref_spatial_consistency_loss(original, enhanced))
    np.testing.assert_allclose(np.asarray(loss), np.asarray(ref), rtol=1e-4, atol=1e-6)

    # bf16 path (exercises the in-kernel f32 cast / native-width DMA)
    B2, C2, H2, W2 = 2, 3, 32, 32
    orig_bf = jax.random.uniform(k3, (B2, C2, H2, W2), jnp.float32).astype(jnp.bfloat16)
    enh_bf = jax.random.uniform(k4, (B2, C2, H2, W2), jnp.float32).astype(jnp.bfloat16)
    loss_bf = jax.block_until_ready(jax.jit(spatial_consistency_loss)(orig_bf, enh_bf))
    ref_bf = jax.block_until_ready(_ref_spatial_consistency_loss(orig_bf, enh_bf))
    np.testing.assert_allclose(np.asarray(loss_bf), np.asarray(ref_bf), rtol=1e-3, atol=1e-6)

    print("KERNEL_OK")
</pallas_src>

<mosaic_0001>
module attributes {stable_mosaic.version = 11 : i64} {
  func.func @_spatial_kernel(%arg0: i32, %arg1: memref<2x3x16x16xf32, #tpu.memory_space<vmem>>, %arg2: memref<2x3x16x16xf32, #tpu.memory_space<vmem>>, %arg3: memref<4x16xf32, #tpu.memory_space<vmem>>, %arg4: memref<16x4xf32, #tpu.memory_space<vmem>>, %arg5: memref<4x4xf32, #tpu.memory_space<vmem>>, %arg6: memref<4x4xf32, #tpu.memory_space<vmem>>, %arg7: memref<4x4xf32, #tpu.memory_space<vmem>>, %arg8: memref<4x4xf32, #tpu.memory_space<vmem>>, %arg9: memref<1x1x128xf32, #tpu.memory_space<vmem>>) attributes {dimension_semantics = [#tpu.dimension_semantics<parallel>], iteration_bounds = array<i64: 2>, scalar_prefetch = 0 : i64, scratch_operands = 0 : i64, tpu.core_type = #tpu.core_type<tc>, window_params = [{transform_indices = @transform_0, window_bounds = array<i64: 2, 3, 16, 16>}, {transform_indices = @transform_1, window_bounds = array<i64: 2, 3, 16, 16>}, {pipeline_mode = #tpu.pipeline_mode<synchronous>, transform_indices = @transform_2, window_bounds = array<i64: 4, 16>}, {pipeline_mode = #tpu.pipeline_mode<synchronous>, transform_indices = @transform_3, window_bounds = array<i64: 16, 4>}, {pipeline_mode = #tpu.pipeline_mode<synchronous>, transform_indices = @transform_4, window_bounds = array<i64: 4, 4>}, {pipeline_mode = #tpu.pipeline_mode<synchronous>, transform_indices = @transform_5, window_bounds = array<i64: 4, 4>}, {pipeline_mode = #tpu.pipeline_mode<synchronous>, transform_indices = @transform_6, window_bounds = array<i64: 4, 4>}, {pipeline_mode = #tpu.pipeline_mode<synchronous>, transform_indices = @transform_7, window_bounds = array<i64: 4, 4>}, {transform_indices = @transform_8, window_bounds = array<i64: 1, 1, 128>}]} {
    %c0 = arith.constant 0 : index
    %c0_0 = arith.constant 0 : index
    %0 = vector.load %arg3[%c0, %c0_0] : memref<4x16xf32, #tpu.memory_space<vmem>>, vector<4x16xf32>
    %c0_1 = arith.constant 0 : index
    %c0_2 = arith.constant 0 : index
    %1 = vector.load %arg4[%c0_1, %c0_2] : memref<16x4xf32, #tpu.memory_space<vmem>>, vector<16x4xf32>
    %c0_3 = arith.constant 0 : index
    %c0_4 = arith.constant 0 : index
    %2 = vector.load %arg5[%c0_3, %c0_4] : memref<4x4xf32, #tpu.memory_space<vmem>>, vector<4x4xf32>
    %c0_5 = arith.constant 0 : index
    %c0_6 = arith.constant 0 : index
    %3 = vector.load %arg6[%c0_5, %c0_6] : memref<4x4xf32, #tpu.memory_space<vmem>>, vector<4x4xf32>
    %c0_7 = arith.constant 0 : index
    %c0_8 = arith.constant 0 : index
    %4 = vector.load %arg7[%c0_7, %c0_8] : memref<4x4xf32, #tpu.memory_space<vmem>>, vector<4x4xf32>
    %c0_9 = arith.constant 0 : index
    %c0_10 = arith.constant 0 : index
    %5 = vector.load %arg8[%c0_9, %c0_10] : memref<4x4xf32, #tpu.memory_space<vmem>>, vector<4x4xf32>
    %cst = arith.constant 0.000000e+00 : f32
    %6 = vector.broadcast %cst : f32 to vector<4x4xf32>
    %c0_11 = arith.constant 0 : index
    %c0_12 = arith.constant 0 : index
    %c0_13 = arith.constant 0 : index
    %c0_14 = arith.constant 0 : index
    %7 = vector.load %arg1[%c0_11, %c0_12, %c0_13, %c0_14] : memref<2x3x16x16xf32, #tpu.memory_space<vmem>>, vector<1x1x16x16xf32>
    %8 = vector.shape_cast %7 : vector<1x1x16x16xf32> to vector<16x16xf32>
    %c0_15 = arith.constant 0 : index
    %c0_16 = arith.constant 0 : index
    %c0_17 = arith.constant 0 : index
    %c0_18 = arith.constant 0 : index
    %9 = vector.load %arg2[%c0_15, %c0_16, %c0_17, %c0_18] : memref<2x3x16x16xf32, #tpu.memory_space<vmem>>, vector<1x1x16x16xf32>
    %10 = vector.shape_cast %9 : vector<1x1x16x16xf32> to vector<16x16xf32>
    %11 = arith.subf %8, %10 : vector<16x16xf32>
    %c0_19 = arith.constant 0 : index
    %c1 = arith.constant 1 : index
    %c0_20 = arith.constant 0 : index
    %c0_21 = arith.constant 0 : index
    %12 = vector.load %arg1[%c0_19, %c1, %c0_20, %c0_21] : memref<2x3x16x16xf32, #tpu.memory_space<vmem>>, vector<1x1x16x16xf32>
    %13 = vector.shape_cast %12 : vector<1x1x16x16xf32> to vector<16x16xf32>
    %c0_22 = arith.constant 0 : index
    %c1_23 = arith.constant 1 : index
    %c0_24 = arith.constant 0 : index
    %c0_25 = arith.constant 0 : index
    %14 = vector.load %arg2[%c0_22, %c1_23, %c0_24, %c0_25] : memref<2x3x16x16xf32, #tpu.memory_space<vmem>>, vector<1x1x16x16xf32>
    %15 = vector.shape_cast %14 : vector<1x1x16x16xf32> to vector<16x16xf32>
    %16 = arith.subf %13, %15 : vector<16x16xf32>
    %17 = arith.addf %11, %16 : vector<16x16xf32>
    %c0_26 = arith.constant 0 : index
    %c2 = arith.constant 2 : index
    %c0_27 = arith.constant 0 : index
    %c0_28 = arith.constant 0 : index
    %18 = vector.load %arg1[%c0_26, %c2, %c0_27, %c0_28] : memref<2x3x16x16xf32, #tpu.memory_space<vmem>>, vector<1x1x16x16xf32>
    %19 = vector.shape_cast %18 : vector<1x1x16x16xf32> to vector<16x16xf32>
    %c0_29 = arith.constant 0 : index
    %c2_30 = arith.constant 2 : index
    %c0_31 = arith.constant 0 : index
    %c0_32 = arith.constant 0 : index
    %20 = vector.load %arg2[%c0_29, %c2_30, %c0_31, %c0_32] : memref<2x3x16x16xf32, #tpu.memory_space<vmem>>, vector<1x1x16x16xf32>
    %21 = vector.shape_cast %20 : vector<1x1x16x16xf32> to vector<16x16xf32>
    %22 = arith.subf %19, %21 : vector<16x16xf32>
    %23 = arith.addf %17, %22 : vector<16x16xf32>
    %cst_33 = arith.constant dense<0.000000e+00> : vector<16x4xf32>
    %24 = tpu.matmul %23, %1, %cst_33 {dimension_numbers = #tpu.dot_dimension_numbers<[1], [0], [0], [1], [0, 0, 1, 1], [], []>} : vector<16x16xf32>, vector<16x4xf32>, vector<16x4xf32> -> vector<16x4xf32>
    %cst_34 = arith.constant dense<0.000000e+00> : vector<4x4xf32>
    %25 = tpu.matmul %0, %24, %cst_34 {dimension_numbers = #tpu.dot_dimension_numbers<[1], [0], [0], [1], [0, 0, 1, 1], [], []>} : vector<4x16xf32>, vector<16x4xf32>, vector<4x4xf32> -> vector<4x4xf32>
    %cst_35 = arith.constant dense<0.000000e+00> : vector<4x4xf32>
    %26 = tpu.matmul %2, %25, %cst_35 {dimension_numbers = #tpu.dot_dimension_numbers<[1], [0], [0], [1], [0, 0, 1, 1], [], []>} : vector<4x4xf32>, vector<4x4xf32>, vector<4x4xf32> -> vector<4x4xf32>
    %cst_36 = arith.constant dense<0.000000e+00> : vector<4x4xf32>
    %27 = tpu.matmul %3, %25, %cst_36 {dimension_numbers = #tpu.dot_dimension_numbers<[1], [0], [0], [1], [0, 0, 1, 1], [], []>} : vector<4x4xf32>, vector<4x4xf32>, vector<4x4xf32> -> vector<4x4xf32>
    %cst_37 = arith.constant dense<0.000000e+00> : vector<4x4xf32>
    %28 = tpu.matmul %25, %4, %cst_37 {dimension_numbers = #tpu.dot_dimension_numbers<[1], [0], [0], [1], [0, 0, 1, 1], [], []>} : vector<4x4xf32>, vector<4x4xf32>, vector<4x4xf32> -> vector<4x4xf32>
    %cst_38 = arith.constant dense<0.000000e+00> : vector<4x4xf32>
    %29 = tpu.matmul %25, %5, %cst_38 {dimension_numbers = #tpu.dot_dimension_numbers<[1], [0], [0], [1], [0, 0, 1, 1], [], []>} : vector<4x4xf32>, vector<4x4xf32>, vector<4x4xf32> -> vector<4x4xf32>
    %30 = arith.subf %25, %28 : vector<4x4xf32>
    %31 = arith.mulf %30, %30 : vector<4x4xf32>
    %32 = arith.subf %25, %29 : vector<4x4xf32>
    %33 = arith.mulf %32, %32 : vector<4x4xf32>
    %34 = arith.addf %31, %33 : vector<4x4xf32>
    %35 = arith.subf %25, %26 : vector<4x4xf32>
    %36 = arith.mulf %35, %35 : vector<4x4xf32>
    %37 = arith.addf %34, %36 : vector<4x4xf32>
    %38 = arith.subf %25, %27 : vector<4x4xf32>
    %39 = arith.mulf %38, %38 : vector<4x4xf32>
    %40 = arith.addf %37, %39 : vector<4x4xf32>
    %41 = arith.addf %6, %40 : vector<4x4xf32>
    %c1_39 = arith.constant 1 : index
    %c0_40 = arith.constant 0 : index
    %c0_41 = arith.constant 0 : index
    %c0_42 = arith.constant 0 : index
    %42 = vector.load %arg1[%c1_39, %c0_40, %c0_41, %c0_42] : memref<2x3x16x16xf32, #tpu.memory_space<vmem>>, vector<1x1x16x16xf32>
    %43 = vector.shape_cast %42 : vector<1x1x16x16xf32> to vector<16x16xf32>
    %c1_43 = arith.constant 1 : index
    %c0_44 = arith.constant 0 : index
    %c0_45 = arith.constant 0 : index
    %c0_46 = arith.constant 0 : index
    %44 = vector.load %arg2[%c1_43, %c0_44, %c0_45, %c0_46] : memref<2x3x16x16xf32, #tpu.memory_space<vmem>>, vector<1x1x16x16xf32>
    %45 = vector.shape_cast %44 : vector<1x1x16x16xf32> to vector<16x16xf32>
    %46 = arith.subf %43, %45 : vector<16x16xf32>
    %c1_47 = arith.constant 1 : index
    %c1_48 = arith.constant 1 : index
    %c0_49 = arith.constant 0 : index
    %c0_50 = arith.constant 0 : index
    %47 = vector.load %arg1[%c1_47, %c1_48, %c0_49, %c0_50] : memref<2x3x16x16xf32, #tpu.memory_space<vmem>>, vector<1x1x16x16xf32>
    %48 = vector.shape_cast %47 : vector<1x1x16x16xf32> to vector<16x16xf32>
    %c1_51 = arith.constant 1 : index
    %c1_52 = arith.constant 1 : index
    %c0_53 = arith.constant 0 : index
    %c0_54 = arith.constant 0 : index
    %49 = vector.load %arg2[%c1_51, %c1_52, %c0_53, %c0_54] : memref<2x3x16x16xf32, #tpu.memory_space<vmem>>, vector<1x1x16x16xf32>
    %50 = vector.shape_cast %49 : vector<1x1x16x16xf32> to vector<16x16xf32>
    %51 = arith.subf %48, %50 : vector<16x16xf32>
    %52 = arith.addf %46, %51 : vector<16x16xf32>
    %c1_55 = arith.constant 1 : index
    %c2_56 = arith.constant 2 : index
    %c0_57 = arith.constant 0 : index
    %c0_58 = arith.constant 0 : index
    %53 = vector.load %arg1[%c1_55, %c2_56, %c0_57, %c0_58] : memref<2x3x16x16xf32, #tpu.memory_space<vmem>>, vector<1x1x16x16xf32>
    %54 = vector.shape_cast %53 : vector<1x1x16x16xf32> to vector<16x16xf32>
    %c1_59 = arith.constant 1 : index
    %c2_60 = arith.constant 2 : index
    %c0_61 = arith.constant 0 : index
    %c0_62 = arith.constant 0 : index
    %55 = vector.load %arg2[%c1_59, %c2_60, %c0_61, %c0_62] : memref<2x3x16x16xf32, #tpu.memory_space<vmem>>, vector<1x1x16x16xf32>
    %56 = vector.shape_cast %55 : vector<1x1x16x16xf32> to vector<16x16xf32>
    %57 = arith.subf %54, %56 : vector<16x16xf32>
    %58 = arith.addf %52, %57 : vector<16x16xf32>
    %cst_63 = arith.constant dense<0.000000e+00> : vector<16x4xf32>
    %59 = tpu.matmul %58, %1, %cst_63 {dimension_numbers = #tpu.dot_dimension_numbers<[1], [0], [0], [1], [0, 0, 1, 1], [], []>} : vector<16x16xf32>, vector<16x4xf32>, vector<16x4xf32> -> vector<16x4xf32>
    %cst_64 = arith.constant dense<0.000000e+00> : vector<4x4xf32>
    %60 = tpu.matmul %0, %59, %cst_64 {dimension_numbers = #tpu.dot_dimension_numbers<[1], [0], [0], [1], [0, 0, 1, 1], [], []>} : vector<4x16xf32>, vector<16x4xf32>, vector<4x4xf32> -> vector<4x4xf32>
    %cst_65 = arith.constant dense<0.000000e+00> : vector<4x4xf32>
    %61 = tpu.matmul %2, %60, %cst_65 {dimension_numbers = #tpu.dot_dimension_numbers<[1], [0], [0], [1], [0, 0, 1, 1], [], []>} : vector<4x4xf32>, vector<4x4xf32>, vector<4x4xf32> -> vector<4x4xf32>
    %cst_66 = arith.constant dense<0.000000e+00> : vector<4x4xf32>
    %62 = tpu.matmul %3, %60, %cst_66 {dimension_numbers = #tpu.dot_dimension_numbers<[1], [0], [0], [1], [0, 0, 1, 1], [], []>} : vector<4x4xf32>, vector<4x4xf32>, vector<4x4xf32> -> vector<4x4xf32>
    %cst_67 = arith.constant dense<0.000000e+00> : vector<4x4xf32>
    %63 = tpu.matmul %60, %4, %cst_67 {dimension_numbers = #tpu.dot_dimension_numbers<[1], [0], [0], [1], [0, 0, 1, 1], [], []>} : vector<4x4xf32>, vector<4x4xf32>, vector<4x4xf32> -> vector<4x4xf32>
    %cst_68 = arith.constant dense<0.000000e+00> : vector<4x4xf32>
    %64 = tpu.matmul %60, %5, %cst_68 {dimension_numbers = #tpu.dot_dimension_numbers<[1], [0], [0], [1], [0, 0, 1, 1], [], []>} : vector<4x4xf32>, vector<4x4xf32>, vector<4x4xf32> -> vector<4x4xf32>
    %65 = arith.subf %60, %63 : vector<4x4xf32>
    %66 = arith.mulf %65, %65 : vector<4x4xf32>
    %67 = arith.subf %60, %64 : vector<4x4xf32>
    %68 = arith.mulf %67, %67 : vector<4x4xf32>
    %69 = arith.addf %66, %68 : vector<4x4xf32>
    %70 = arith.subf %60, %61 : vector<4x4xf32>
    %71 = arith.mulf %70, %70 : vector<4x4xf32>
    %72 = arith.addf %69, %71 : vector<4x4xf32>
    %73 = arith.subf %60, %62 : vector<4x4xf32>
    %74 = arith.mulf %73, %73 : vector<4x4xf32>
    %75 = arith.addf %72, %74 : vector<4x4xf32>
    %76 = arith.addf %41, %75 : vector<4x4xf32>
    %77 = vector.shape_cast %76 : vector<4x4xf32> to vector<1x4x4xf32>
    %cst_69 = arith.constant dense<0.000000e+00> : vector<1xf32>
    %78 = vector.multi_reduction <add>, %77, %cst_69 [1, 2] : vector<1x4x4xf32> to vector<1xf32>
    %79 = vector.shape_cast %78 : vector<1xf32> to vector<1x1x1xf32>
    %80 = vector.extract %79[0, 0, 0] : f32 from vector<1x1x1xf32>
    %81 = vector.broadcast %80 : f32 to vector<1x1x128xf32>
    %c0_70 = arith.constant 0 : index
    %c0_71 = arith.constant 0 : index
    %c0_72 = arith.constant 0 : index
    %82 = vector.load %arg9[%c0_70, %c0_71, %c0_72] : memref<1x1x128xf32, #tpu.memory_space<vmem>>, vector<1x1x128xf32>
    tpu.vector_store %arg9[%c0_70, %c0_71, %c0_72], %81 {strides = array<i32>} : memref<1x1x128xf32, #tpu.memory_space<vmem>>, vector<1x1x128xf32>,
    return
  }
  func.func @transform_0(%arg0: i32) -> (i32, i32, i32, i32) {
    %c0_i32 = arith.constant 0 : i32
    %c0_i32_0 = arith.constant 0 : i32
    %c0_i32_1 = arith.constant 0 : i32
    %c0_i32_2 = arith.constant 0 : i32
    return %arg0, %c0_i32, %c0_i32_0, %c0_i32_1 : i32, i32, i32, i32
  }
  func.func @transform_1(%arg0: i32) -> (i32, i32, i32, i32) {
    %c0_i32 = arith.constant 0 : i32
    %c0_i32_0 = arith.constant 0 : i32
    %c0_i32_1 = arith.constant 0 : i32
    %c0_i32_2 = arith.constant 0 : i32
    return %arg0, %c0_i32, %c0_i32_0, %c0_i32_1 : i32, i32, i32, i32
  }
  func.func @transform_2(%arg0: i32) -> (i32, i32) {
    %c0_i32 = arith.constant 0 : i32
    %c0_i32_0 = arith.constant 0 : i32
    %c0_i32_1 = arith.constant 0 : i32
    return %c0_i32, %c0_i32_0 : i32, i32
  }
  func.func @transform_3(%arg0: i32) -> (i32, i32) {
    %c0_i32 = arith.constant 0 : i32
    %c0_i32_0 = arith.constant 0 : i32
    %c0_i32_1 = arith.constant 0 : i32
    return %c0_i32, %c0_i32_0 : i32, i32
  }
  func.func @transform_4(%arg0: i32) -> (i32, i32) {
    %c0_i32 = arith.constant 0 : i32
    %c0_i32_0 = arith.constant 0 : i32
    %c0_i32_1 = arith.constant 0 : i32
    return %c0_i32, %c0_i32_0 : i32, i32
  }
  func.func @transform_5(%arg0: i32) -> (i32, i32) {
    %c0_i32 = arith.constant 0 : i32
    %c0_i32_0 = arith.constant 0 : i32
    %c0_i32_1 = arith.constant 0 : i32
    return %c0_i32, %c0_i32_0 : i32, i32
  }
  func.func @transform_6(%arg0: i32) -> (i32, i32) {
    %c0_i32 = arith.constant 0 : i32
    %c0_i32_0 = arith.constant 0 : i32
    %c0_i32_1 = arith.constant 0 : i32
    return %c0_i32, %c0_i32_0 : i32, i32
  }
  func.func @transform_7(%arg0: i32) -> (i32, i32) {
    %c0_i32 = arith.constant 0 : i32
    %c0_i32_0 = arith.constant 0 : i32
    %c0_i32_1 = arith.constant 0 : i32
    return %c0_i32, %c0_i32_0 : i32, i32
  }
  func.func @transform_8(%arg0: i32) -> (i32, i32, i32) {
    %c0_i32 = arith.constant 0 : i32
    %c0_i32_0 = arith.constant 0 : i32
    %c0_i32_1 = arith.constant 0 : i32
    return %arg0, %c0_i32, %c0_i32_0 : i32, i32, i32
  }
}

</mosaic_0001>

<llo_original>
// kernel: spatial_consistency_loss.1
$region0: #{spatial_consistency_loss.1}
  #allocation0 [shape = 'u32[]', space=smem, size = 0x4, offset = 0x4, fixed_abs, tag = 'smem constant byte address 0x4 - core index']
  #allocation1 [shape = 'u32[144,128]{1,0:T(1,128)}', space=vmem, size = 0x12000, scoped, tag = 'internal scratch']
  %s0 = inlined_call_operand.hbm [shape: f32[4,3,16,16], index: 0, kind: input, shape index: {}]
  %s1 = inlined_call_operand.hbm [shape: f32[4,3,16,16], index: 1, kind: input, shape index: {}]
  %s2 = inlined_call_operand.hbm [shape: f32[4,16], index: 2, kind: input, shape index: {}]
  %s3 = inlined_call_operand.hbm [shape: f32[16,4], index: 3, kind: input, shape index: {}]
  %s4 = inlined_call_operand.vmem [shape: f32[4,4], index: 4, kind: input, shape index: {}, may-alias: {4,7}]
  %s5 = inlined_call_operand.vmem [shape: f32[4,4], index: 5, kind: input, shape index: {}, may-alias: {5,6}]
  %s6 = inlined_call_operand.vmem [shape: f32[4,4], index: 6, kind: input, shape index: {}, may-alias: {5,6}]
  %s7 = inlined_call_operand.vmem [shape: f32[4,4], index: 7, kind: input, shape index: {}, may-alias: {4,7}]
  %s8 = inlined_call_operand.vmem [shape: f32[2,1,128], index: 8, kind: output, shape index: {}]
  %s9 = sld [smem:[#allocation0]]
  $region81: #{spatial_consistency_loss.1} parent=0
    _
  %s11 = ssub.s32 1, %s9
  %s12 = scalar_select 0, %s11, %s9
  $region1: #{spatial_consistency_loss.1} parent=0
    #allocation2 [shape = 'u8[98304]{0}', space=vmem, size = 0x18000, scoped, tag = 'input window, operand 0']
    #allocation3 [shape = 's32[2]{0}', space=sflag, size = 0x8, scoped, tag = 'scoped memory for spatial_consistency_loss.1']
    #allocation4 [shape = 'u8[98304]{0}', space=vmem, size = 0x18000, scoped, tag = 'input window, operand 1']
    #allocation5 [shape = 's32[2]{0}', space=sflag, size = 0x8, scoped, tag = 'scoped memory for spatial_consistency_loss.1']
    #allocation6 [shape = 'u8[2048]{0}', space=vmem, size = 0x800, scoped, tag = 'input window, operand 2, single buffered']
    #allocation7 [shape = 'u8[8192]{0}', space=vmem, size = 0x2000, scoped, tag = 'input window, operand 3, single buffered']
    #allocation8 [shape = 's32[1]{0}', space=sflag, size = 0x4, scoped, tag = 'scoped memory for spatial_consistency_loss.1']
    %13 = vsyncpa [#allocation3], 0
    %s14 = scalar_lea.sflag [#allocation3], 1
    %15 = vsyncpa %s14, 0
    %16 = vsyncpa [#allocation5], 0
    %s17 = scalar_lea.sflag [#allocation5], 1
    %18 = vsyncpa %s17, 0
    %19 = vsyncpa [#allocation8], 0
    loop: start=0, step=1, limit=4
    $region2: #{spatial_consistency_loss.1} parent=1 // loop_pre_header
      _
    $region3: #{spatial_consistency_loss.1} parent=1 // loop_header
      %s21 = sphi 0, %s25
      %p22 = scmp.ge.s32.totalorder %s21, 4
      %s31 = sphi 0, %s33
      %s34 = sphi 0, %s31
      %s35 = sphi 0, %s34
      %s51 = sphi 0, %s35
      %s57 = sphi 0, %s59
      %s60 = sphi 0, %s57
      %s61 = sphi 0, %s60
      %s77 = sphi 0, %s61
      %s81 = sphi 0, %s81
      %s83 = sphi 0, %s81
      %s84 = sphi 0, %s83
      %s98 = sphi 0, %s84
      %s102 = sphi 0, %s102
      %s104 = sphi 0, %s102
      %s105 = sphi 0, %s104
      %s119 = sphi 0, %s105
      %s123 = sphi 0, %s123
      %s125 = sphi 0, %s123
      %s126 = sphi 0, %s125
      %s140 = sphi 0, %s126
      %s144 = sphi 0, %s144
      %s146 = sphi 0, %s144
      %s147 = sphi 0, %s146
      %s161 = sphi 0, %s147
      %s165 = sphi 0, %s165
      %s167 = sphi 0, %s165
      %s168 = sphi 0, %s167
      %s182 = sphi 0, %s168
      %s186 = sphi 0, %s186
      %s188 = sphi 0, %s186
      %s189 = sphi 0, %s188
      %s203 = sphi 0, %s189
      %s209 = sphi 0, %s211
      %s212 = sphi 0, %s209
      %s213 = sphi 0, %s212
      %s229 = sphi 0, %s213
    $region4: #{spatial_consistency_loss.1} parent=1 // loop_header_branch
      %24 = sbr.rel (%p22) target = $region8
    $region5: #{spatial_consistency_loss.1} parent=1 // loop_body
      %s26 = ssub.s32 %s21, 1
      %s27 = ssub.s32 %s21, 2
      %s28 = sadd.s32 %s21, 1
      %s29 = ssub.s32 %s21, %s28
      %p30 = scmp.eq.s32.totalorder %s29, 0
      %s32 = sadd.s32 %s31, 1
      %s33 = scalar_select %p30, %s31, %s32
      %p36 = pneg %p30
      %p37 = scmp.eq.s32.totalorder %s21, 1
      %p38 = por %p36, %p37
      %p39 = scmp.ne.s32.totalorder %s31, %s34
      %p40 = scmp.eq.s32.totalorder %s21, 0
      %p41 = por %p39, %p40
      %p42 = scmp.ne.s32.totalorder %s31, %s34
      %p43 = scmp.eq.s32.totalorder %s26, 1
      %p44 = por %p42, %p43
      %p45 = scmp.ne.s32.totalorder %s34, %s35
      %p46 = scmp.eq.s32.totalorder %s26, 0
      %p47 = por %p45, %p46
      %p48 = scmp.ne.s32.totalorder %s34, %s35
      %p49 = scmp.eq.s32.totalorder %s27, 1
      %p50 = por %p48, %p49
      %p52 = scmp.ne.s32.totalorder %s35, %s51
      %p53 = scmp.eq.s32.totalorder %s27, 0
      %p54 = por %p52, %p53
      %s55 = ssub.s32 %s21, %s28
      %p56 = scmp.eq.s32.totalorder %s55, 0
      %s58 = sadd.s32 %s57, 1
      %s59 = scalar_select %p56, %s57, %s58
      %p62 = pneg %p56
      %p63 = scmp.eq.s32.totalorder %s21, 1
      %p64 = por %p62, %p63
      %p65 = scmp.ne.s32.totalorder %s57, %s60
      %p66 = scmp.eq.s32.totalorder %s21, 0
      %p67 = por %p65, %p66
      %p68 = scmp.ne.s32.totalorder %s57, %s60
      %p69 = scmp.eq.s32.totalorder %s26, 1
      %p70 = por %p68, %p69
      %p71 = scmp.ne.s32.totalorder %s60, %s61
      %p72 = scmp.eq.s32.totalorder %s26, 0
      %p73 = por %p71, %p72
      %p74 = scmp.ne.s32.totalorder %s60, %s61
      %p75 = scmp.eq.s32.totalorder %s27, 1
      %p76 = por %p74, %p75
      %p78 = scmp.ne.s32.totalorder %s61, %s77
      %p79 = scmp.eq.s32.totalorder %s27, 0
      %p80 = por %p78, %p79
      %s82 = sadd.s32 %s81, 1
      %p85 = scmp.eq.s32.totalorder %s21, 1
      %p86 = scmp.ne.s32.totalorder %s81, %s83
      %p87 = scmp.eq.s32.totalorder %s21, 0
      %p88 = por %p86, %p87
      %p89 = scmp.ne.s32.totalorder %s81, %s83
      %p90 = scmp.eq.s32.totalorder %s26, 1
      %p91 = por %p89, %p90
      %p92 = scmp.ne.s32.totalorder %s83, %s84
      %p93 = scmp.eq.s32.totalorder %s26, 0
      %p94 = por %p92, %p93
      %p95 = scmp.ne.s32.totalorder %s83, %s84
      %p96 = scmp.eq.s32.totalorder %s27, 1
      %p97 = por %p95, %p96
      %p99 = scmp.ne.s32.totalorder %s84, %s98
      %p100 = scmp.eq.s32.totalorder %s27, 0
      %p101 = por %p99, %p100
      %s103 = sadd.s32 %s102, 1
      %p106 = scmp.eq.s32.totalorder %s21, 1
      %p107 = scmp.ne.s32.totalorder %s102, %s104
      %p108 = scmp.eq.s32.totalorder %s21, 0
      %p109 = por %p107, %p108
      %p110 = scmp.ne.s32.totalorder %s102, %s104
      %p111 = scmp.eq.s32.totalorder %s26, 1
      %p112 = por %p110, %p111
      %p113 = scmp.ne.s32.totalorder %s104, %s105
      %p114 = scmp.eq.s32.totalorder %s26, 0
      %p115 = por %p113, %p114
      %p116 = scmp.ne.s32.totalorder %s104, %s105
      %p117 = scmp.eq.s32.totalorder %s27, 1
      %p118 = por %p116, %p117
      %p120 = scmp.ne.s32.totalorder %s105, %s119
      %p121 = scmp.eq.s32.totalorder %s27, 0
      %p122 = por %p120, %p121
      %s124 = sadd.s32 %s123, 1
      %p127 = scmp.eq.s32.totalorder %s21, 1
      %p128 = scmp.ne.s32.totalorder %s123, %s125
      %p129 = scmp.eq.s32.totalorder %s21, 0
      %p130 = por %p128, %p129
      %p131 = scmp.ne.s32.totalorder %s123, %s125
      %p132 = scmp.eq.s32.totalorder %s26, 1
      %p133 = por %p131, %p132
      %p134 = scmp.ne.s32.totalorder %s125, %s126
      %p135 = scmp.eq.s32.totalorder %s26, 0
      %p136 = por %p134, %p135
      %p137 = scmp.ne.s32.totalorder %s125, %s126
      %p138 = scmp.eq.s32.totalorder %s27, 1
      %p139 = por %p137, %p138
      %p141 = scmp.ne.s32.totalorder %s126, %s140
      %p142 = scmp.eq.s32.totalorder %s27, 0
      %p143 = por %p141, %p142
      %s145 = sadd.s32 %s144, 1
      %p148 = scmp.eq.s32.totalorder %s21, 1
      %p149 = scmp.ne.s32.totalorder %s144, %s146
      %p150 = scmp.eq.s32.totalorder %s21, 0
      %p151 = por %p149, %p150
      %p152 = scmp.ne.s32.totalorder %s144, %s146
      %p153 = scmp.eq.s32.totalorder %s26, 1
      %p154 = por %p152, %p153
      %p155 = scmp.ne.s32.totalorder %s146, %s147
      %p156 = scmp.eq.s32.totalorder %s26, 0
      %p157 = por %p155, %p156
      %p158 = scmp.ne.s32.totalorder %s146, %s147
      %p159 = scmp.eq.s32.totalorder %s27, 1
      %p160 = por %p158, %p159
      %p162 = scmp.ne.s32.totalorder %s147, %s161
      %p163 = scmp.eq.s32.totalorder %s27, 0
      %p164 = por %p162, %p163
      %s166 = sadd.s32 %s165, 1
      %p169 = scmp.eq.s32.totalorder %s21, 1
      %p170 = scmp.ne.s32.totalorder %s165, %s167
      %p171 = scmp.eq.s32.totalorder %s21, 0
      %p172 = por %p170, %p171
      %p173 = scmp.ne.s32.totalorder %s165, %s167
      %p174 = scmp.eq.s32.totalorder %s26, 1
      %p175 = por %p173, %p174
      %p176 = scmp.ne.s32.totalorder %s167, %s168
      %p177 = scmp.eq.s32.totalorder %s26, 0
      %p178 = por %p176, %p177
      %p179 = scmp.ne.s32.totalorder %s167, %s168
      %p180 = scmp.eq.s32.totalorder %s27, 1
      %p181 = por %p179, %p180
      %p183 = scmp.ne.s32.totalorder %s168, %s182
      %p184 = scmp.eq.s32.totalorder %s27, 0
      %p185 = por %p183, %p184
      %s187 = sadd.s32 %s186, 1
      %p190 = scmp.eq.s32.totalorder %s21, 1
      %p191 = scmp.ne.s32.totalorder %s186, %s188
      %p192 = scmp.eq.s32.totalorder %s21, 0
      %p193 = por %p191, %p192
      %p194 = scmp.ne.s32.totalorder %s186, %s188
      %p195 = scmp.eq.s32.totalorder %s26, 1
      %p196 = por %p194, %p195
      %p197 = scmp.ne.s32.totalorder %s188, %s189
      %p198 = scmp.eq.s32.totalorder %s26, 0
      %p199 = por %p197, %p198
      %p200 = scmp.ne.s32.totalorder %s188, %s189
      %p201 = scmp.eq.s32.totalorder %s27, 1
      %p202 = por %p200, %p201
      %p204 = scmp.ne.s32.totalorder %s189, %s203
      %p205 = scmp.eq.s32.totalorder %s27, 0
      %p206 = por %p204, %p205
      %s207 = ssub.s32 %s21, %s28
      %p208 = scmp.eq.s32.totalorder %s207, 0
      %s210 = sadd.s32 %s209, 1
      %s211 = scalar_select %p208, %s209, %s210
      %p214 = pneg %p208
      %p215 = scmp.eq.s32.totalorder %s21, 1
      %p216 = por %p214, %p215
      %p217 = scmp.ne.s32.totalorder %s209, %s212
      %p218 = scmp.eq.s32.totalorder %s21, 0
      %p219 = por %p217, %p218
      %p220 = scmp.ne.s32.totalorder %s209, %s212
      %p221 = scmp.eq.s32.totalorder %s26, 1
      %p222 = por %p220, %p221
      %p223 = scmp.ne.s32.totalorder %s212, %s213
      %p224 = scmp.eq.s32.totalorder %s26, 0
      %p225 = por %p223, %p224
      %p226 = scmp.ne.s32.totalorder %s212, %s213
      %p227 = scmp.eq.s32.totalorder %s27, 1
      %p228 = por %p226, %p227
      %p230 = scmp.ne.s32.totalorder %s213, %s229
      %p231 = scmp.eq.s32.totalorder %s27, 0
      %p232 = por %p230, %p231
      %p233 = scmp.le.s32.totalorder 1, %s21
      %p234 = scmp.lt.s32.totalorder %s21, 3
      %p235 = pnand %p233, %p234
      %p236 = pneg %p235
      // Predicated region
      $region9: #{spatial_consistency_loss.1} parent=5 // pred_check
        _
      $region10: #{spatial_consistency_loss.1} parent=5 // pred_check_branch
        %238 = sbr.rel (%p235) target = $region12
      $region11: #{spatial_consistency_loss.1} parent=5 // pred_region
        %s239 = ssub.s32 %s21, 1
        // Predicated region
        $region13: #{spatial_consistency_loss.1} parent=11 // pred_check
          %p240 = pneg %p94
        $region14: #{spatial_consistency_loss.1} parent=11 // pred_check_branch
          %242 = sbr.rel (%p240) target = $region16
        $region15: #{spatial_consistency_loss.1} parent=11 // pred_region
          %s244 = ssub.s32 64, 64
          %245 = vsyncadd [#allocation5], %s244
          %s247 = sshll.u32 [#allocation6], 4
          %s248 = int_to_ptr.vmem [resolvable:$true] %s247
          %250 = dma.hbm_to_vmem [thread:$0]  %s2, 64, %s248, [#allocation5]
        $region16: #{spatial_consistency_loss.1} parent=11 // pred_fallthru
          _
        // Predicated region
        $region17: #{spatial_consistency_loss.1} parent=11 // pred_check
          %p251 = pneg %p115
        $region18: #{spatial_consistency_loss.1} parent=11 // pred_check_branch
          %253 = sbr.rel (%p251) target = $region20
        $region19: #{spatial_consistency_loss.1} parent=11 // pred_region
          %s255 = ssub.s32 256, 256
          %256 = vsyncadd [#allocation8], %s255
          %s257 = sshll.u32 [#allocation7], 4
          %s258 = int_to_ptr.vmem [resolvable:$true] %s257
          %263 = dma.hbm_to_vmem [thread:$0]  %s3, 256, %s258, [#allocation8], 128, 128, 8
        $region20: #{spatial_consistency_loss.1} parent=11 // pred_fallthru
          _
        // Predicated region
        $region21: #{spatial_consistency_loss.1} parent=11 // pred_check
          %p264 = pneg %p136
        $region22: #{spatial_consistency_loss.1} parent=11 // pred_check_branch
          %266 = sbr.rel (%p264) target = $region24
        $region23: #{spatial_consistency_loss.1} parent=11 // pred_region
          _
        $region24: #{spatial_consistency_loss.1} parent=11 // pred_fallthru
          _
        // Predicated region
        $region25: #{spatial_consistency_loss.1} parent=11 // pred_check
          %p267 = pneg %p157
        $region26: #{spatial_consistency_loss.1} parent=11 // pred_check_branch
          %269 = sbr.rel (%p267) target = $region28
        $region27: #{spatial_consistency_loss.1} parent=11 // pred_region
          _
        $region28: #{spatial_consistency_loss.1} parent=11 // pred_fallthru
          _
        // Predicated region
        $region29: #{spatial_consistency_loss.1} parent=11 // pred_check
          %p270 = pneg %p178
        $region30: #{spatial_consistency_loss.1} parent=11 // pred_check_branch
          %272 = sbr.rel (%p270) target = $region32
        $region31: #{spatial_consistency_loss.1} parent=11 // pred_region
          _
        $region32: #{spatial_consistency_loss.1} parent=11 // pred_fallthru
          _
        // Predicated region
        $region33: #{spatial_consistency_loss.1} parent=11 // pred_check
          %p273 = pneg %p199
        $region34: #{spatial_consistency_loss.1} parent=11 // pred_check_branch
          %275 = sbr.rel (%p273) target = $region36
        $region35: #{spatial_consistency_loss.1} parent=11 // pred_region
          _
        $region36: #{spatial_consistency_loss.1} parent=11 // pred_fallthru
          _
      $region12: #{spatial_consistency_loss.1} parent=5 // pred_fallthru
        _
      %p276 = scmp.lt.s32.totalorder %s21, 2
      // Predicated region
      $region37: #{spatial_consistency_loss.1} parent=5 // pred_check
        %p277 = pneg %p276
      $region38: #{spatial_consistency_loss.1} parent=5 // pred_check_branch
        %279 = sbr.rel (%p277) target = $region40
      $region39: #{spatial_consistency_loss.1} parent=5 // pred_region
        // Predicated region
        $region41: #{spatial_consistency_loss.1} parent=39 // pred_check
          %p280 = pneg %p41
        $region42: #{spatial_consistency_loss.1} parent=39 // pred_check_branch
          %282 = sbr.rel (%p280) target = $region44
        $region43: #{spatial_consistency_loss.1} parent=39 // pred_region
          %s283 = sand.u32 %s31, 1
          %s284 = scalar_lea.sflag [#allocation3], %s283
          %s285 = sand.u32 %s31, 1
          %s286 = smul.addr %s285, 96
          %s287 = scalar_lea.vmem [#allocation2], %s286
          %s288 = smul.u32 2, %s21
          %s290 = ssub.s32 1536, 1536
          %291 = vsyncadd %s284, %s290
          %s292 = smul.addr %s288, 6
          %s293 = smul.addr %s292, 128
          %s294 = scalar_lea.hbm %s0, %s293
          %s295 = sshll.u32 %s287, 4
          %s296 = int_to_ptr.vmem [resolvable:$true] %s295
          %301 = dma.hbm_to_vmem [thread:$0]  %s294, 1536, %s296, %s284, 128, 128, 8
        $region44: #{spatial_consistency_loss.1} parent=39 // pred_fallthru
          _
        // Predicated region
        $region45: #{spatial_consistency_loss.1} parent=39 // pred_check
          %p302 = pneg %p67
        $region46: #{spatial_consistency_loss.1} parent=39 // pred_check_branch
          %304 = sbr.rel (%p302) target = $region48
        $region47: #{spatial_consistency_loss.1} parent=39 // pred_region
          %s305 = sand.u32 %s21, 1
          %s306 = scalar_lea.sflag [#allocation5], %s305
          %s307 = sand.u32 %s57, 1
          %s308 = smul.addr %s307, 96
          %s309 = scalar_lea.vmem [#allocation4], %s308
          %s310 = smul.u32 2, %s21
          %s312 = ssub.s32 1536, 1536
          %313 = vsyncadd %s306, %s312
          %s314 = smul.addr %s310, 6
          %s315 = smul.addr %s314, 128
          %s316 = scalar_lea.hbm %s1, %s315
          %s317 = sshll.u32 %s309, 4
          %s318 = int_to_ptr.vmem [resolvable:$true] %s317
          %323 = dma.hbm_to_vmem [thread:$0]  %s316, 1536, %s318, %s306, 128, 128, 8
        $region48: #{spatial_consistency_loss.1} parent=39 // pred_fallthru
          _
      $region40: #{spatial_consistency_loss.1} parent=5 // pred_fallthru
        _
      %p324 = scmp.le.s32.totalorder 1, %s21
      %p325 = scmp.lt.s32.totalorder %s21, 3
      %p326 = pnand %p324, %p325
      %p327 = pneg %p326
      // Predicated region
      $region49: #{spatial_consistency_loss.1} parent=5 // pred_check
        _
      $region50: #{spatial_consistency_loss.1} parent=5 // pred_check_branch
        %329 = sbr.rel (%p326) target = $region52
      $region51: #{spatial_consistency_loss.1} parent=5 // pred_region
        %s330 = ssub.s32 %s21, 1
        %s331 = sand.u32 %s34, 1
        %s332 = scalar_lea.sflag [#allocation3], %s331
        %s333 = sand.u32 %s34, 1
        %s334 = smul.addr %s333, 96
        %s335 = scalar_lea.vmem [#allocation2], %s334
        // Predicated region
        $region53: #{spatial_consistency_loss.1} parent=51 // pred_check
          %p336 = pneg %p47
        $region54: #{spatial_consistency_loss.1} parent=51 // pred_check_branch
          %338 = sbr.rel (%p336) target = $region56
        $region55: #{spatial_consistency_loss.1} parent=51 // pred_region
          %339 = dma.done %s332, 1536
        $region56: #{spatial_consistency_loss.1} parent=51 // pred_fallthru
          _
        %s340 = sand.u32 %s26, 1
        %s341 = scalar_lea.sflag [#allocation5], %s340
        %s342 = sand.u32 %s60, 1
        %s343 = smul.addr %s342, 96
        %s344 = scalar_lea.vmem [#allocation4], %s343
        // Predicated region
        $region57: #{spatial_consistency_loss.1} parent=51 // pred_check
          %p345 = pneg %p73
        $region58: #{spatial_consistency_loss.1} parent=51 // pred_check_branch
          %347 = sbr.rel (%p345) target = $region60
        $region59: #{spatial_consistency_loss.1} parent=51 // pred_region
          %348 = dma.done %s341, 1536
        $region60: #{spatial_consistency_loss.1} parent=51 // pred_fallthru
          _
        // Predicated region
        $region61: #{spatial_consistency_loss.1} parent=51 // pred_check
          %p349 = pneg %p94
        $region62: #{spatial_consistency_loss.1} parent=51 // pred_check_branch
          %351 = sbr.rel (%p349) target = $region64
        $region63: #{spatial_consistency_loss.1} parent=51 // pred_region
          %352 = dma.done [#allocation5], 64
        $region64: #{spatial_consistency_loss.1} parent=51 // pred_fallthru
          _
        // Predicated region
        $region65: #{spatial_consistency_loss.1} parent=51 // pred_check
          %p353 = pneg %p115
        $region66: #{spatial_consistency_loss.1} parent=51 // pred_check_branch
          %355 = sbr.rel (%p353) target = $region68
        $region67: #{spatial_consistency_loss.1} parent=51 // pred_region
          %356 = dma.done [#allocation8], 256
        $region68: #{spatial_consistency_loss.1} parent=51 // pred_fallthru
          _
        %s357 = sand.u32 %s34, 1
        %s358 = scalar_lea.sflag [#allocation3], %s357
        %s359 = sand.u32 %s34, 1
        %s360 = smul.addr %s359, 96
        %s361 = scalar_lea.vmem [#allocation2], %s360
        %p362 = pneg %p47
        %p363 = pneg %p44
        %s364 = sand.u32 %s26, 1
        %s365 = scalar_lea.sflag [#allocation5], %s364
        %s366 = sand.u32 %s60, 1
        %s367 = smul.addr %s366, 96
        %s368 = scalar_lea.vmem [#allocation4], %s367
        %p369 = pneg %p73
        %p370 = pneg %p70
        %p371 = pneg %p94
        %p372 = pneg %p91
        %p373 = pneg %p115
        %p374 = pneg %p112
        %p375 = pneg %p136
        %p376 = pneg %p133
        %p377 = pneg %p157
        %p378 = pneg %p154
        %p379 = pneg %p178
        %p380 = pneg %p175
        %p381 = pneg %p199
        %p382 = pneg %p196
        %p383 = pneg %p225
        %p384 = pneg %p222
        %p385 = scmp.lt.s32.totalorder %s26, 1
        %s386 = scalar_select %p385, %s26, 1
        %s387 = scalar_lea.vmem %s8, %s386
        %s388 = smul.u32 2, %s26
        %s389 = smul.u32 2, %s26
        %p390 = scmp.lt.s32.totalorder %s26, 1
        %s391 = scalar_select %p390, %s26, 1
        %s392 = scalar_lea.vmem %s8, %s391
        %v393 = vld [vmem:[#allocation6] sm:$0xf]
        %v394 = vld [vmem:[#allocation7] sm:$0xff]
        %v395 = vld [vmem:[#allocation7 + $0x8] sm:$0xff]
        %v396 = vld [vmem:[%s4] sm:$0xf]
        %v397 = vld [vmem:[%s5] sm:$0xf]
        %v398 = vld [vmem:[%s6] sm:$0xf]
        %v399 = vld [vmem:[%s7] sm:$0xf]
        %v400 = vld [vmem:[%s335] sm:$0xff]
        %v401 = vld [vmem:[%s335 + $0x8] sm:$0xff]
        %v402 = vld [vmem:[%s344] sm:$0xff]
        %v403 = vld [vmem:[%s344 + $0x8] sm:$0xff]
        %v404 = vsub.f32 %v400, %v402
        %v405 = vsub.f32 %v401, %v403
        %s406 = scalar_lea.vmem %s335, 16 [#allocation2]
        %v407 = vld [vmem:[%s406] sm:$0xff]
        %v408 = vld [vmem:[%s406 + $0x8] sm:$0xff]
        %s409 = scalar_lea.vmem %s344, 16 [#allocation4]
        %v410 = vld [vmem:[%s409] sm:$0xff]
        %v411 = vld [vmem:[%s409 + $0x8] sm:$0xff]
        %v412 = vsub.f32 %v407, %v410
        %v413 = vsub.f32 %v408, %v411
        %v414 = vadd.f32 %v404, %v412
        %v415 = vadd.f32 %v405, %v413
        %s416 = scalar_lea.vmem %s335, 32 [#allocation2]
        %v417 = vld [vmem:[%s416] sm:$0xff]
        %v418 = vld [vmem:[%s416 + $0x8] sm:$0xff]
        %s419 = scalar_lea.vmem %s344, 32 [#allocation4]
        %v420 = vld [vmem:[%s419] sm:$0xff]
        %v421 = vld [vmem:[%s419 + $0x8] sm:$0xff]
        %v422 = vsub.f32 %v417, %v420
        %v423 = vsub.f32 %v418, %v421
        %v424 = vadd.f32 %v414, %v422
        %v425 = vadd.f32 %v415, %v423
        %vm426 = vcmask 130048
        %v428 = vsel %vm426, %v424, 0
        %v431 = vsel %vm426, %v425, 0
        %433 = vmatprep.subr.mxu0 0.0
        %434 = vmatpush1.msra.mxu0 %v394
        %435 = vmatprep.subr.mxu0 0.0
        %436 = vmatpush1.msra.mxu0 %v395
        %437 = vmatprep.subr.mxu0 0.0
        %438 = vmatpush1.msra.mxu0 0.0
        %439 = vmatprep.subr.mxu0 0.0
        %440 = vmatpush1.msra.mxu0 0.0
        %441 = vmatprep.subr.mxu0 0.0
        %442 = vmatpush1.msra.mxu0 0.0
        %443 = vmatprep.subr.mxu0 0.0
        %444 = vmatpush1.msra.mxu0 0.0
        %445 = vmatprep.subr.mxu0 0.0
        %446 = vmatpush1.msra.mxu0 0.0
        %447 = vmatprep.subr.mxu0 0.0
        %448 = vmatpush1.msra.mxu0 0.0
        %449 = vmatprep.subr.mxu0 0.0
        %450 = vmatpush1.msra.mxu0 0.0
        %451 = vmatprep.subr.mxu0 0.0
        %452 = vmatpush1.msra.mxu0 0.0
        %453 = vmatprep.subr.mxu0 0.0
        %454 = vmatpush1.msra.mxu0 0.0
        %455 = vmatprep.subr.mxu0 0.0
        %456 = vmatpush1.msra.mxu0 0.0
        %457 = vmatprep.subr.mxu0 0.0
        %458 = vmatpush1.msra.mxu0 0.0
        %459 = vmatprep.subr.mxu0 0.0
        %460 = vmatpush1.msra.mxu0 0.0
        %461 = vmatprep.subr.mxu0 0.0
        %462 = vmatpush1.msra.mxu0 0.0
        %463 = vmatprep.subr.mxu0 0.0
        %464 = vmatpush1.msra.mxu0 0.0
        %465 = vmatprep.subr.mxu0 0.0
        %466 = vmatpush1.msra.mxu0 0.0
        %467 = vmatprep.subr.mxu0 0.0
        %468 = vmatpush1.msra.mxu0 0.0
        %469 = vmatprep.subr.mxu0 0.0
        %470 = vmatpush1.msra.mxu0 0.0
        %471 = vmatprep.subr.mxu0 0.0
        %472 = vmatpush1.msra.mxu0 0.0
        %473 = vmatprep.subr.mxu0 0.0
        %474 = vmatpush1.msra.mxu0 0.0
        %475 = vmatprep.subr.mxu0 0.0
        %476 = vmatpush1.msra.mxu0 0.0
        %477 = vmatprep.subr.mxu0 0.0
        %478 = vmatpush1.msra.mxu0 0.0
        %479 = vmatprep.subr.mxu0 0.0
        %480 = vmatpush1.msra.mxu0 0.0
        %481 = vmatprep.subr.mxu0 0.0
        %482 = vmatpush1.msra.mxu0 0.0
        %483 = vmatprep.subr.mxu0 0.0
        %484 = vmatpush1.msra.mxu0 0.0
        %485 = vmatprep.subr.mxu0 0.0
        %486 = vmatpush1.msra.mxu0 0.0
        %487 = vmatprep.subr.mxu0 0.0
        %488 = vmatpush1.msra.mxu0 0.0
        %489 = vmatprep.subr.mxu0 0.0
        %490 = vmatpush1.msra.mxu0 0.0
        %491 = vmatprep.subr.mxu0 0.0
        %492 = vmatpush1.msra.mxu0 0.0
        %493 = vmatprep.subr.mxu0 0.0
        %494 = vmatpush1.msra.mxu0 0.0
        %495 = vmatprep.subr.mxu0 0.0
        %496 = vmatpush1.msra.mxu0 0.0
        %497 = vmatprep.mubr.f32.mxu0 0.0
        %498 = vmatmul.mubr.f32.gmra.mrb[0].mxu0 %v428
        %v499 = vpop.f32.mrb[0].mxu0
        %v500 = vadd.f32 0.0, %v499
        %v501 = vpop.f32.mrb[0].mxu0
        %502 = vmatprep.mubr.f32.mxu0 0.0
        %503 = vmatmul.mubr.f32.gmra.mrb[0].mxu0 %v431
        %v504 = vpop.f32.mrb[0].mxu0
        %v505 = vadd.f32 0.0, %v504
        %v506 = vpop.f32.mrb[0].mxu0
        %507 = vdwg.mxu0
        %v509 = vsel %vm426, %v393, 0
        %511 = vmatprep.subr.mxu0 0.0
        %512 = vmatpush1.msra.mxu0 %v500
        %513 = vmatprep.subr.mxu0 0.0
        %514 = vmatpush1.msra.mxu0 %v505
        %515 = vmatprep.subr.mxu0 0.0
        %516 = vmatpush1.msra.mxu0 0.0
        %517 = vmatprep.subr.mxu0 0.0
        %518 = vmatpush1.msra.mxu0 0.0
        %519 = vmatprep.subr.mxu0 0.0
        %520 = vmatpush1.msra.mxu0 0.0
        %521 = vmatprep.subr.mxu0 0.0
        %522 = vmatpush1.msra.mxu0 0.0
        %523 = vmatprep.subr.mxu0 0.0
        %524 = vmatpush1.msra.mxu0 0.0
        %525 = vmatprep.subr.mxu0 0.0
        %526 = vmatpush1.msra.mxu0 0.0
        %527 = vmatprep.subr.mxu0 0.0
        %528 = vmatpush1.msra.mxu0 0.0
        %529 = vmatprep.subr.mxu0 0.0
        %530 = vmatpush1.msra.mxu0 0.0
        %531 = vmatprep.subr.mxu0 0.0
        %532 = vmatpush1.msra.mxu0 0.0
        %533 = vmatprep.subr.mxu0 0.0
        %534 = vmatpush1.msra.mxu0 0.0
        %535 = vmatprep.subr.mxu0 0.0
        %536 = vmatpush1.msra.mxu0 0.0
        %537 = vmatprep.subr.mxu0 0.0
        %538 = vmatpush1.msra.mxu0 0.0
        %539 = vmatprep.subr.mxu0 0.0
        %540 = vmatpush1.msra.mxu0 0.0
        %541 = vmatprep.subr.mxu0 0.0
        %542 = vmatpush1.msra.mxu0 0.0
        %543 = vmatprep.subr.mxu0 0.0
        %544 = vmatpush1.msra.mxu0 0.0
        %545 = vmatprep.subr.mxu0 0.0
        %546 = vmatpush1.msra.mxu0 0.0
        %547 = vmatprep.subr.mxu0 0.0
        %548 = vmatpush1.msra.mxu0 0.0
        %549 = vmatprep.subr.mxu0 0.0
        %550 = vmatpush1.msra.mxu0 0.0
        %551 = vmatprep.subr.mxu0 0.0
        %552 = vmatpush1.msra.mxu0 0.0
        %553 = vmatprep.subr.mxu0 0.0
        %554 = vmatpush1.msra.mxu0 0.0
        %555 = vmatprep.subr.mxu0 0.0
        %556 = vmatpush1.msra.mxu0 0.0
        %557 = vmatprep.subr.mxu0 0.0
        %558 = vmatpush1.msra.mxu0 0.0
        %559 = vmatprep.subr.mxu0 0.0
        %560 = vmatpush1.msra.mxu0 0.0
        %561 = vmatprep.subr.mxu0 0.0
        %562 = vmatpush1.msra.mxu0 0.0
        %563 = vmatprep.subr.mxu0 0.0
        %564 = vmatpush1.msra.mxu0 0.0
        %565 = vmatprep.subr.mxu0 0.0
        %566 = vmatpush1.msra.mxu0 0.0
        %567 = vmatprep.subr.mxu0 0.0
        %568 = vmatpush1.msra.mxu0 0.0
        %569 = vmatprep.subr.mxu0 0.0
        %570 = vmatpush1.msra.mxu0 0.0
        %571 = vmatprep.subr.mxu0 0.0
        %572 = vmatpush1.msra.mxu0 0.0
        %573 = vmatprep.subr.mxu0 0.0
        %574 = vmatpush1.msra.mxu0 0.0
        %575 = vmatprep.mubr.f32.mxu0 0.0
        %576 = vmatmul.mubr.f32.gmra.mrb[0].mxu0 %v509
        %v577 = vpop.f32.mrb[0].mxu0
        %v578 = vadd.f32 0.0, %v577
        %v579 = vpop.f32.mrb[0].mxu0
        %580 = vdwg.mxu0
        %vm581 = vcmask 31744
        %v583 = vsel %vm581, %v396, 0
        %vm585 = vcmask 1043456
        %v587 = vsel %vm585, %v578, 0
        %589 = vmatprep.subr.mxu0 0.0
        %590 = vmatpush1.msra.mxu0 %v587
        %591 = vmatprep.subr.mxu0 0.0
        %592 = vmatpush1.msra.mxu0 0.0
        %593 = vmatprep.subr.mxu0 0.0
        %594 = vmatpush1.msra.mxu0 0.0
        %595 = vmatprep.subr.mxu0 0.0
        %596 = vmatpush1.msra.mxu0 0.0
        %597 = vmatprep.subr.mxu0 0.0
        %598 = vmatpush1.msra.mxu0 0.0
        %599 = vmatprep.subr.mxu0 0.0
        %600 = vmatpush1.msra.mxu0 0.0
        %601 = vmatprep.subr.mxu0 0.0
        %602 = vmatpush1.msra.mxu0 0.0
        %603 = vmatprep.subr.mxu0 0.0
        %604 = vmatpush1.msra.mxu0 0.0
        %605 = vmatprep.subr.mxu0 0.0
        %606 = vmatpush1.msra.mxu0 0.0
        %607 = vmatprep.subr.mxu0 0.0
        %608 = vmatpush1.msra.mxu0 0.0
        %609 = vmatprep.subr.mxu0 0.0
        %610 = vmatpush1.msra.mxu0 0.0
        %611 = vmatprep.subr.mxu0 0.0
        %612 = vmatpush1.msra.mxu0 0.0
        %613 = vmatprep.subr.mxu0 0.0
        %614 = vmatpush1.msra.mxu0 0.0
        %615 = vmatprep.subr.mxu0 0.0
        %616 = vmatpush1.msra.mxu0 0.0
        %617 = vmatprep.subr.mxu0 0.0
        %618 = vmatpush1.msra.mxu0 0.0
        %619 = vmatprep.subr.mxu0 0.0
        %620 = vmatpush1.msra.mxu0 0.0
        %621 = vmatprep.subr.mxu0 0.0
        %622 = vmatpush1.msra.mxu0 0.0
        %623 = vmatprep.subr.mxu0 0.0
        %624 = vmatpush1.msra.mxu0 0.0
        %625 = vmatprep.subr.mxu0 0.0
        %626 = vmatpush1.msra.mxu0 0.0
        %627 = vmatprep.subr.mxu0 0.0
        %628 = vmatpush1.msra.mxu0 0.0
        %629 = vmatprep.subr.mxu0 0.0
        %630 = vmatpush1.msra.mxu0 0.0
        %631 = vmatprep.subr.mxu0 0.0
        %632 = vmatpush1.msra.mxu0 0.0
        %633 = vmatprep.subr.mxu0 0.0
        %634 = vmatpush1.msra.mxu0 0.0
        %635 = vmatprep.subr.mxu0 0.0
        %636 = vmatpush1.msra.mxu0 0.0
        %637 = vmatprep.subr.mxu0 0.0
        %638 = vmatpush1.msra.mxu0 0.0
        %639 = vmatprep.subr.mxu0 0.0
        %640 = vmatpush1.msra.mxu0 0.0
        %641 = vmatprep.subr.mxu0 0.0
        %642 = vmatpush1.msra.mxu0 0.0
        %643 = vmatprep.subr.mxu0 0.0
        %644 = vmatpush1.msra.mxu0 0.0
        %645 = vmatprep.subr.mxu0 0.0
        %646 = vmatpush1.msra.mxu0 0.0
        %647 = vmatprep.subr.mxu0 0.0
        %648 = vmatpush1.msra.mxu0 0.0
        %649 = vmatprep.subr.mxu0 0.0
        %650 = vmatpush1.msra.mxu0 0.0
        %651 = vmatprep.subr.mxu0 0.0
        %652 = vmatpush1.msra.mxu0 0.0
        %653 = vmatprep.mubr.f32.mxu0 0.0
        %654 = vmatmul.mubr.f32.gmra.mrb[0].mxu0 %v583
        %v655 = vpop.f32.mrb[0].mxu0
        %v656 = vadd.f32 0.0, %v655
        %v657 = vpop.f32.mrb[0].mxu0
        %658 = vdwg.mxu0
        %v660 = vsel %vm581, %v397, 0
        %662 = vmatprep.subr.mxu0 0.0
        %663 = vmatpush1.msra.mxu0 %v587
        %664 = vmatprep.subr.mxu0 0.0
        %665 = vmatpush1.msra.mxu0 0.0
        %666 = vmatprep.subr.mxu0 0.0
        %667 = vmatpush1.msra.mxu0 0.0
        %668 = vmatprep.subr.mxu0 0.0
        %669 = vmatpush1.msra.mxu0 0.0
        %670 = vmatprep.subr.mxu0 0.0
        %671 = vmatpush1.msra.mxu0 0.0
        %672 = vmatprep.subr.mxu0 0.0
        %673 = vmatpush1.msra.mxu0 0.0
        %674 = vmatprep.subr.mxu0 0.0
        %675 = vmatpush1.msra.mxu0 0.0
        %676 = vmatprep.subr.mxu0 0.0
        %677 = vmatpush1.msra.mxu0 0.0
        %678 = vmatprep.subr.mxu0 0.0
        %679 = vmatpush1.msra.mxu0 0.0
        %680 = vmatprep.subr.mxu0 0.0
        %681 = vmatpush1.msra.mxu0 0.0
        %682 = vmatprep.subr.mxu0 0.0
        %683 = vmatpush1.msra.mxu0 0.0
        %684 = vmatprep.subr.mxu0 0.0
        %685 = vmatpush1.msra.mxu0 0.0
        %686 = vmatprep.subr.mxu0 0.0
        %687 = vmatpush1.msra.mxu0 0.0
        %688 = vmatprep.subr.mxu0 0.0
        %689 = vmatpush1.msra.mxu0 0.0
        %690 = vmatprep.subr.mxu0 0.0
        %691 = vmatpush1.msra.mxu0 0.0
        %692 = vmatprep.subr.mxu0 0.0
        %693 = vmatpush1.msra.mxu0 0.0
        %694 = vmatprep.subr.mxu0 0.0
        %695 = vmatpush1.msra.mxu0 0.0
        %696 = vmatprep.subr.mxu0 0.0
        %697 = vmatpush1.msra.mxu0 0.0
        %698 = vmatprep.subr.mxu0 0.0
        %699 = vmatpush1.msra.mxu0 0.0
        %700 = vmatprep.subr.mxu0 0.0
        %701 = vmatpush1.msra.mxu0 0.0
        %702 = vmatprep.subr.mxu0 0.0
        %703 = vmatpush1.msra.mxu0 0.0
        %704 = vmatprep.subr.mxu0 0.0
        %705 = vmatpush1.msra.mxu0 0.0
        %706 = vmatprep.subr.mxu0 0.0
        %707 = vmatpush1.msra.mxu0 0.0
        %708 = vmatprep.subr.mxu0 0.0
        %709 = vmatpush1.msra.mxu0 0.0
        %710 = vmatprep.subr.mxu0 0.0
        %711 = vmatpush1.msra.mxu0 0.0
        %712 = vmatprep.subr.mxu0 0.0
        %713 = vmatpush1.msra.mxu0 0.0
        %714 = vmatprep.subr.mxu0 0.0
        %715 = vmatpush1.msra.mxu0 0.0
        %716 = vmatprep.subr.mxu0 0.0
        %717 = vmatpush1.msra.mxu0 0.0
        %718 = vmatprep.subr.mxu0 0.0
        %719 = vmatpush1.msra.mxu0 0.0
        %720 = vmatprep.subr.mxu0 0.0
        %721 = vmatpush1.msra.mxu0 0.0
        %722 = vmatprep.subr.mxu0 0.0
        %723 = vmatpush1.msra.mxu0 0.0
        %724 = vmatprep.subr.mxu0 0.0
        %725 = vmatpush1.msra.mxu0 0.0
        %726 = vmatprep.mubr.f32.mxu0 0.0
        %727 = vmatmul.mubr.f32.gmra.mrb[0].mxu0 %v660
        %v728 = vpop.f32.mrb[0].mxu0
        %v729 = vadd.f32 0.0, %v728
        %v730 = vpop.f32.mrb[0].mxu0
        %731 = vdwg.mxu0
        %v732 = vsel %vm581, %v578, 0
        %v735 = vsel %vm585, %v398, 0
        %737 = vmatprep.subr.mxu0 0.0
        %738 = vmatpush1.msra.mxu0 %v735
        %739 = vmatprep.subr.mxu0 0.0
        %740 = vmatpush1.msra.mxu0 0.0
        %741 = vmatprep.subr.mxu0 0.0
        %742 = vmatpush1.msra.mxu0 0.0
        %743 = vmatprep.subr.mxu0 0.0
        %744 = vmatpush1.msra.mxu0 0.0
        %745 = vmatprep.subr.mxu0 0.0
        %746 = vmatpush1.msra.mxu0 0.0
        %747 = vmatprep.subr.mxu0 0.0
        %748 = vmatpush1.msra.mxu0 0.0
        %749 = vmatprep.subr.mxu0 0.0
        %750 = vmatpush1.msra.mxu0 0.0
        %751 = vmatprep.subr.mxu0 0.0
        %752 = vmatpush1.msra.mxu0 0.0
        %753 = vmatprep.subr.mxu0 0.0
        %754 = vmatpush1.msra.mxu0 0.0
        %755 = vmatprep.subr.mxu0 0.0
        %756 = vmatpush1.msra.mxu0 0.0
        %757 = vmatprep.subr.mxu0 0.0
        %758 = vmatpush1.msra.mxu0 0.0
        %759 = vmatprep.subr.mxu0 0.0
        %760 = vmatpush1.msra.mxu0 0.0
        %761 = vmatprep.subr.mxu0 0.0
        %762 = vmatpush1.msra.mxu0 0.0
        %763 = vmatprep.subr.mxu0 0.0
        %764 = vmatpush1.msra.mxu0 0.0
        %765 = vmatprep.subr.mxu0 0.0
        %766 = vmatpush1.msra.mxu0 0.0
        %767 = vmatprep.subr.mxu0 0.0
        %768 = vmatpush1.msra.mxu0 0.0
        %769 = vmatprep.subr.mxu0 0.0
        %770 = vmatpush1.msra.mxu0 0.0
        %771 = vmatprep.subr.mxu0 0.0
        %772 = vmatpush1.msra.mxu0 0.0
        %773 = vmatprep.subr.mxu0 0.0
        %774 = vmatpush1.msra.mxu0 0.0
        %775 = vmatprep.subr.mxu0 0.0
        %776 = vmatpush1.msra.mxu0 0.0
        %777 = vmatprep.subr.mxu0 0.0
        %778 = vmatpush1.msra.mxu0 0.0
        %779 = vmatprep.subr.mxu0 0.0
        %780 = vmatpush1.msra.mxu0 0.0
        %781 = vmatprep.subr.mxu0 0.0
        %782 = vmatpush1.msra.mxu0 0.0
        %783 = vmatprep.subr.mxu0 0.0
        %784 = vmatpush1.msra.mxu0 0.0
        %785 = vmatprep.subr.mxu0 0.0
        %786 = vmatpush1.msra.mxu0 0.0
        %787 = vmatprep.subr.mxu0 0.0
        %788 = vmatpush1.msra.mxu0 0.0
        %789 = vmatprep.subr.mxu0 0.0
        %790 = vmatpush1.msra.mxu0 0.0
        %791 = vmatprep.subr.mxu0 0.0
        %792 = vmatpush1.msra.mxu0 0.0
        %793 = vmatprep.subr.mxu0 0.0
        %794 = vmatpush1.msra.mxu0 0.0
        %795 = vmatprep.subr.mxu0 0.0
        %796 = vmatpush1.msra.mxu0 0.0
        %797 = vmatprep.subr.mxu0 0.0
        %798 = vmatpush1.msra.mxu0 0.0
        %799 = vmatprep.subr.mxu0 0.0
        %800 = vmatpush1.msra.mxu0 0.0
        %801 = vmatprep.mubr.f32.mxu0 0.0
        %802 = vmatmul.mubr.f32.gmra.mrb[0].mxu0 %v732
        %v803 = vpop.f32.mrb[0].mxu0
        %v804 = vadd.f32 0.0, %v803
        %v805 = vpop.f32.mrb[0].mxu0
        %806 = vdwg.mxu0
        %v808 = vsel %vm585, %v399, 0
        %810 = vmatprep.subr.mxu0 0.0
        %811 = vmatpush1.msra.mxu0 %v808
        %812 = vmatprep.subr.mxu0 0.0
        %813 = vmatpush1.msra.mxu0 0.0
        %814 = vmatprep.subr.mxu0 0.0
        %815 = vmatpush1.msra.mxu0 0.0
        %816 = vmatprep.subr.mxu0 0.0
        %817 = vmatpush1.msra.mxu0 0.0
        %818 = vmatprep.subr.mxu0 0.0
        %819 = vmatpush1.msra.mxu0 0.0
        %820 = vmatprep.subr.mxu0 0.0
        %821 = vmatpush1.msra.mxu0 0.0
        %822 = vmatprep.subr.mxu0 0.0
        %823 = vmatpush1.msra.mxu0 0.0
        %824 = vmatprep.subr.mxu0 0.0
        %825 = vmatpush1.msra.mxu0 0.0
        %826 = vmatprep.subr.mxu0 0.0
        %827 = vmatpush1.msra.mxu0 0.0
        %828 = vmatprep.subr.mxu0 0.0
        %829 = vmatpush1.msra.mxu0 0.0
        %830 = vmatprep.subr.mxu0 0.0
        %831 = vmatpush1.msra.mxu0 0.0
        %832 = vmatprep.subr.mxu0 0.0
        %833 = vmatpush1.msra.mxu0 0.0
        %834 = vmatprep.subr.mxu0 0.0
        %835 = vmatpush1.msra.mxu0 0.0
        %836 = vmatprep.subr.mxu0 0.0
        %837 = vmatpush1.msra.mxu0 0.0
        %838 = vmatprep.subr.mxu0 0.0
        %839 = vmatpush1.msra.mxu0 0.0
        %840 = vmatprep.subr.mxu0 0.0
        %841 = vmatpush1.msra.mxu0 0.0
        %842 = vmatprep.subr.mxu0 0.0
        %843 = vmatpush1.msra.mxu0 0.0
        %844 = vmatprep.subr.mxu0 0.0
        %845 = vmatpush1.msra.mxu0 0.0
        %846 = vmatprep.subr.mxu0 0.0
        %847 = vmatpush1.msra.mxu0 0.0
        %848 = vmatprep.subr.mxu0 0.0
        %849 = vmatpush1.msra.mxu0 0.0
        %850 = vmatprep.subr.mxu0 0.0
        %851 = vmatpush1.msra.mxu0 0.0
        %852 = vmatprep.subr.mxu0 0.0
        %853 = vmatpush1.msra.mxu0 0.0
        %854 = vmatprep.subr.mxu0 0.0
        %855 = vmatpush1.msra.mxu0 0.0
        %856 = vmatprep.subr.mxu0 0.0
        %857 = vmatpush1.msra.mxu0 0.0
        %858 = vmatprep.subr.mxu0 0.0
        %859 = vmatpush1.msra.mxu0 0.0
        %860 = vmatprep.subr.mxu0 0.0
        %861 = vmatpush1.msra.mxu0 0.0
        %862 = vmatprep.subr.mxu0 0.0
        %863 = vmatpush1.msra.mxu0 0.0
        %864 = vmatprep.subr.mxu0 0.0
        %865 = vmatpush1.msra.mxu0 0.0
        %866 = vmatprep.subr.mxu0 0.0
        %867 = vmatpush1.msra.mxu0 0.0
        %868 = vmatprep.subr.mxu0 0.0
        %869 = vmatpush1.msra.mxu0 0.0
        %870 = vmatprep.subr.mxu0 0.0
        %871 = vmatpush1.msra.mxu0 0.0
        %872 = vmatprep.subr.mxu0 0.0
        %873 = vmatpush1.msra.mxu0 0.0
        %874 = vmatprep.mubr.f32.mxu0 0.0
        %875 = vmatmul.mubr.f32.gmra.mrb[0].mxu0 %v732
        %v876 = vpop.f32.mrb[0].mxu0
        %v877 = vadd.f32 0.0, %v876
        %v878 = vpop.f32.mrb[0].mxu0
        %879 = vdwg.mxu0
        %v880 = vsub.f32 %v578, %v804
        %v881 = vmul.f32 %v880, %v880
        %v882 = vsub.f32 %v578, %v877
        %v883 = vmul.f32 %v882, %v882
        %v884 = vadd.f32 %v881, %v883
        %v885 = vsub.f32 %v578, %v656
        %v886 = vmul.f32 %v885, %v885
        %v887 = vadd.f32 %v884, %v886
        %v888 = vsub.f32 %v578, %v729
        %v889 = vmul.f32 %v888, %v888
        %v890 = vadd.f32 %v887, %v889
        %v891 = vadd.f32 %v890, 0.0
        %s892 = scalar_lea.vmem %s335, 48 [#allocation2]
        %v893 = vld [vmem:[%s892] sm:$0xff]
        %v894 = vld [vmem:[%s892 + $0x8] sm:$0xff]
        %s895 = scalar_lea.vmem %s344, 48 [#allocation4]
        %v896 = vld [vmem:[%s895] sm:$0xff]
        %v897 = vld [vmem:[%s895 + $0x8] sm:$0xff]
        %v898 = vsub.f32 %v893, %v896
        %v899 = vsub.f32 %v894, %v897
        %s900 = scalar_lea.vmem %s335, 64 [#allocation2]
        %v901 = vld [vmem:[%s900] sm:$0xff]
        %v902 = vld [vmem:[%s900 + $0x8] sm:$0xff]
        %s903 = scalar_lea.vmem %s344, 64 [#allocation4]
        %v904 = vld [vmem:[%s903] sm:$0xff]
        %v905 = vld [vmem:[%s903 + $0x8] sm:$0xff]
        %v906 = vsub.f32 %v901, %v904
        %v907 = vsub.f32 %v902, %v905
        %v908 = vadd.f32 %v898, %v906
        %v909 = vadd.f32 %v899, %v907
        %s910 = scalar_lea.vmem %s335, 80 [#allocation2]
        %v911 = vld [vmem:[%s910] sm:$0xff]
        %v912 = vld [vmem:[%s910 + $0x8] sm:$0xff]
        %s913 = scalar_lea.vmem %s344, 80 [#allocation4]
        %v914 = vld [vmem:[%s913] sm:$0xff]
        %v915 = vld [vmem:[%s913 + $0x8] sm:$0xff]
        %v916 = vsub.f32 %v911, %v914
        %v917 = vsub.f32 %v912, %v915
        %v918 = vadd.f32 %v908, %v916
        %v919 = vadd.f32 %v909, %v917
        %v921 = vsel %vm426, %v918, 0
        %v924 = vsel %vm426, %v919, 0
        %926 = vmatprep.subr.mxu0 0.0
        %927 = vmatpush1.msra.mxu0 %v394
        %928 = vmatprep.subr.mxu0 0.0
        %929 = vmatpush1.msra.mxu0 %v395
        %930 = vmatprep.subr.mxu0 0.0
        %931 = vmatpush1.msra.mxu0 0.0
        %932 = vmatprep.subr.mxu0 0.0
        %933 = vmatpush1.msra.mxu0 0.0
        %934 = vmatprep.subr.mxu0 0.0
        %935 = vmatpush1.msra.mxu0 0.0
        %936 = vmatprep.subr.mxu0 0.0
        %937 = vmatpush1.msra.mxu0 0.0
        %938 = vmatprep.subr.mxu0 0.0
        %939 = vmatpush1.msra.mxu0 0.0
        %940 = vmatprep.subr.mxu0 0.0
        %941 = vmatpush1.msra.mxu0 0.0
        %942 = vmatprep.subr.mxu0 0.0
        %943 = vmatpush1.msra.mxu0 0.0
        %944 = vmatprep.subr.mxu0 0.0
        %945 = vmatpush1.msra.mxu0 0.0
        %946 = vmatprep.subr.mxu0 0.0
        %947 = vmatpush1.msra.mxu0 0.0
        %948 = vmatprep.subr.mxu0 0.0
        %949 = vmatpush1.msra.mxu0 0.0
        %950 = vmatprep.subr.mxu0 0.0
        %951 = vmatpush1.msra.mxu0 0.0
        %952 = vmatprep.subr.mxu0 0.0
        %953 = vmatpush1.msra.mxu0 0.0
        %954 = vmatprep.subr.mxu0 0.0
        %955 = vmatpush1.msra.mxu0 0.0
        %956 = vmatprep.subr.mxu0 0.0
        %957 = vmatpush1.msra.mxu0 0.0
        %958 = vmatprep.subr.mxu0 0.0
        %959 = vmatpush1.msra.mxu0 0.0
        %960 = vmatprep.subr.mxu0 0.0
        %961 = vmatpush1.msra.mxu0 0.0
        %962 = vmatprep.subr.mxu0 0.0
        %963 = vmatpush1.msra.mxu0 0.0
        %964 = vmatprep.subr.mxu0 0.0
        %965 = vmatpush1.msra.mxu0 0.0
        %966 = vmatprep.subr.mxu0 0.0
        %967 = vmatpush1.msra.mxu0 0.0
        %968 = vmatprep.subr.mxu0 0.0
        %969 = vmatpush1.msra.mxu0 0.0
        %970 = vmatprep.subr.mxu0 0.0
        %971 = vmatpush1.msra.mxu0 0.0
        %972 = vmatprep.subr.mxu0 0.0
        %973 = vmatpush1.msra.mxu0 0.0
        %974 = vmatprep.subr.mxu0 0.0
        %975 = vmatpush1.msra.mxu0 0.0
        %976 = vmatprep.subr.mxu0 0.0
        %977 = vmatpush1.msra.mxu0 0.0
        %978 = vmatprep.subr.mxu0 0.0
        %979 = vmatpush1.msra.mxu0 0.0
        %980 = vmatprep.subr.mxu0 0.0
        %981 = vmatpush1.msra.mxu0 0.0
        %982 = vmatprep.subr.mxu0 0.0
        %983 = vmatpush1.msra.mxu0 0.0
        %984 = vmatprep.subr.mxu0 0.0
        %985 = vmatpush1.msra.mxu0 0.0
        %986 = vmatprep.subr.mxu0 0.0
        %987 = vmatpush1.msra.mxu0 0.0
        %988 = vmatprep.subr.mxu0 0.0
        %989 = vmatpush1.msra.mxu0 0.0
        %990 = vmatprep.mubr.f32.mxu0 0.0
        %991 = vmatmul.mubr.f32.gmra.mrb[0].mxu0 %v921
        %v992 = vpop.f32.mrb[0].mxu0
        %v993 = vadd.f32 0.0, %v992
        %v994 = vpop.f32.mrb[0].mxu0
        %995 = vmatprep.mubr.f32.mxu0 0.0
        %996 = vmatmul.mubr.f32.gmra.mrb[0].mxu0 %v924
        %v997 = vpop.f32.mrb[0].mxu0
        %v998 = vadd.f32 0.0, %v997
        %v999 = vpop.f32.mrb[0].mxu0
        %1000 = vdwg.mxu0
        %1001 = vmatprep.subr.mxu0 0.0
        %1002 = vmatpush1.msra.mxu0 %v993
        %1003 = vmatprep.subr.mxu0 0.0
        %1004 = vmatpush1.msra.mxu0 %v998
        %1005 = vmatprep.subr.mxu0 0.0
        %1006 = vmatpush1.msra.mxu0 0.0
        %1007 = vmatprep.subr.mxu0 0.0
        %1008 = vmatpush1.msra.mxu0 0.0
        %1009 = vmatprep.subr.mxu0 0.0
        %1010 = vmatpush1.msra.mxu0 0.0
        %1011 = vmatprep.subr.mxu0 0.0
        %1012 = vmatpush1.msra.mxu0 0.0
        %1013 = vmatprep.subr.mxu0 0.0
        %1014 = vmatpush1.msra.mxu0 0.0
        %1015 = vmatprep.subr.mxu0 0.0
        %1016 = vmatpush1.msra.mxu0 0.0
        %1017 = vmatprep.subr.mxu0 0.0
        %1018 = vmatpush1.msra.mxu0 0.0
        %1019 = vmatprep.subr.mxu0 0.0
        %1020 = vmatpush1.msra.mxu0 0.0
        %1021 = vmatprep.subr.mxu0 0.0
        %1022 = vmatpush1.msra.mxu0 0.0
        %1023 = vmatprep.subr.mxu0 0.0
        %1024 = vmatpush1.msra.mxu0 0.0
        %1025 = vmatprep.subr.mxu0 0.0
        %1026 = vmatpush1.msra.mxu0 0.0
        %1027 = vmatprep.subr.mxu0 0.0
        %1028 = vmatpush1.msra.mxu0 0.0
        %1029 = vmatprep.subr.mxu0 0.0
        %1030 = vmatpush1.msra.mxu0 0.0
        %1031 = vmatprep.subr.mxu0 0.0
        %1032 = vmatpush1.msra.mxu0 0.0
        %1033 = vmatprep.subr.mxu0 0.0
        %1034 = vmatpush1.msra.mxu0 0.0
        %1035 = vmatprep.subr.mxu0 0.0
        %1036 = vmatpush1.msra.mxu0 0.0
        %1037 = vmatprep.subr.mxu0 0.0
        %1038 = vmatpush1.msra.mxu0 0.0
        %1039 = vmatprep.subr.mxu0 0.0
        %1040 = vmatpush1.msra.mxu0 0.0
        %1041 = vmatprep.subr.mxu0 0.0
        %1042 = vmatpush1.msra.mxu0 0.0
        %1043 = vmatprep.subr.mxu0 0.0
        %1044 = vmatpush1.msra.mxu0 0.0
        %1045 = vmatprep.subr.mxu0 0.0
        %1046 = vmatpush1.msra.mxu0 0.0
        %1047 = vmatprep.subr.mxu0 0.0
        %1048 = vmatpush1.msra.mxu0 0.0
        %1049 = vmatprep.subr.mxu0 0.0
        %1050 = vmatpush1.msra.mxu0 0.0
        %1051 = vmatprep.subr.mxu0 0.0
        %1052 = vmatpush1.msra.mxu0 0.0
        %1053 = vmatprep.subr.mxu0 0.0
        %1054 = vmatpush1.msra.mxu0 0.0
        %1055 = vmatprep.subr.mxu0 0.0
        %1056 = vmatpush1.msra.mxu0 0.0
        %1057 = vmatprep.subr.mxu0 0.0
        %1058 = vmatpush1.msra.mxu0 0.0
        %1059 = vmatprep.subr.mxu0 0.0
        %1060 = vmatpush1.msra.mxu0 0.0
        %1061 = vmatprep.subr.mxu0 0.0
        %1062 = vmatpush1.msra.mxu0 0.0
        %1063 = vmatprep.subr.mxu0 0.0
        %1064 = vmatpush1.msra.mxu0 0.0
        %1065 = vmatprep.mubr.f32.mxu0 0.0
        %1066 = vmatmul.mubr.f32.gmra.mrb[0].mxu0 %v509
        %v1067 = vpop.f32.mrb[0].mxu0
        %v1068 = vadd.f32 0.0, %v1067
        %v1069 = vpop.f32.mrb[0].mxu0
        %1070 = vdwg.mxu0
        %v1072 = vsel %vm585, %v1068, 0
        %1074 = vmatprep.subr.mxu0 0.0
        %1075 = vmatpush1.msra.mxu0 %v1072
        %1076 = vmatprep.subr.mxu0 0.0
        %1077 = vmatpush1.msra.mxu0 0.0
        %1078 = vmatprep.subr.mxu0 0.0
        %1079 = vmatpush1.msra.mxu0 0.0
        %1080 = vmatprep.subr.mxu0 0.0
        %1081 = vmatpush1.msra.mxu0 0.0
        %1082 = vmatprep.subr.mxu0 0.0
        %1083 = vmatpush1.msra.mxu0 0.0
        %1084 = vmatprep.subr.mxu0 0.0
        %1085 = vmatpush1.msra.mxu0 0.0
        %1086 = vmatprep.subr.mxu0 0.0
        %1087 = vmatpush1.msra.mxu0 0.0
        %1088 = vmatprep.subr.mxu0 0.0
        %1089 = vmatpush1.msra.mxu0 0.0
        %1090 = vmatprep.subr.mxu0 0.0
        %1091 = vmatpush1.msra.mxu0 0.0
        %1092 = vmatprep.subr.mxu0 0.0
        %1093 = vmatpush1.msra.mxu0 0.0
        %1094 = vmatprep.subr.mxu0 0.0
        %1095 = vmatpush1.msra.mxu0 0.0
        %1096 = vmatprep.subr.mxu0 0.0
        %1097 = vmatpush1.msra.mxu0 0.0
        %1098 = vmatprep.subr.mxu0 0.0
        %1099 = vmatpush1.msra.mxu0 0.0
        %1100 = vmatprep.subr.mxu0 0.0
        %1101 = vmatpush1.msra.mxu0 0.0
        %1102 = vmatprep.subr.mxu0 0.0
        %1103 = vmatpush1.msra.mxu0 0.0
        %1104 = vmatprep.subr.mxu0 0.0
        %1105 = vmatpush1.msra.mxu0 0.0
        %1106 = vmatprep.subr.mxu0 0.0
        %1107 = vmatpush1.msra.mxu0 0.0
        %1108 = vmatprep.subr.mxu0 0.0
        %1109 = vmatpush1.msra.mxu0 0.0
        %1110 = vmatprep.subr.mxu0 0.0
        %1111 = vmatpush1.msra.mxu0 0.0
        %1112 = vmatprep.subr.mxu0 0.0
        %1113 = vmatpush1.msra.mxu0 0.0
        %1114 = vmatprep.subr.mxu0 0.0
        %1115 = vmatpush1.msra.mxu0 0.0
        %1116 = vmatprep.subr.mxu0 0.0
        %1117 = vmatpush1.msra.mxu0 0.0
        %1118 = vmatprep.subr.mxu0 0.0
        %1119 = vmatpush1.msra.mxu0 0.0
        %1120 = vmatprep.subr.mxu0 0.0
        %1121 = vmatpush1.msra.mxu0 0.0
        %1122 = vmatprep.subr.mxu0 0.0
        %1123 = vmatpush1.msra.mxu0 0.0
        %1124 = vmatprep.subr.mxu0 0.0
        %1125 = vmatpush1.msra.mxu0 0.0
        %1126 = vmatprep.subr.mxu0 0.0
        %1127 = vmatpush1.msra.mxu0 0.0
        %1128 = vmatprep.subr.mxu0 0.0
        %1129 = vmatpush1.msra.mxu0 0.0
        %1130 = vmatprep.subr.mxu0 0.0
        %1131 = vmatpush1.msra.mxu0 0.0
        %1132 = vmatprep.subr.mxu0 0.0
        %1133 = vmatpush1.msra.mxu0 0.0
        %1134 = vmatprep.subr.mxu0 0.0
        %1135 = vmatpush1.msra.mxu0 0.0
        %1136 = vmatprep.subr.mxu0 0.0
        %1137 = vmatpush1.msra.mxu0 0.0
        %1138 = vmatprep.mubr.f32.mxu0 0.0
        %1139 = vmatmul.mubr.f32.gmra.mrb[0].mxu0 %v583
        %v1140 = vpop.f32.mrb[0].mxu0
        %v1141 = vadd.f32 0.0, %v1140
        %v1142 = vpop.f32.mrb[0].mxu0
        %1143 = vdwg.mxu0
        %1144 = vmatprep.subr.mxu0 0.0
        %1145 = vmatpush1.msra.mxu0 %v1072
        %1146 = vmatprep.subr.mxu0 0.0
        %1147 = vmatpush1.msra.mxu0 0.0
        %1148 = vmatprep.subr.mxu0 0.0
        %1149 = vmatpush1.msra.mxu0 0.0
        %1150 = vmatprep.subr.mxu0 0.0
        %1151 = vmatpush1.msra.mxu0 0.0
        %1152 = vmatprep.subr.mxu0 0.0
        %1153 = vmatpush1.msra.mxu0 0.0
        %1154 = vmatprep.subr.mxu0 0.0
        %1155 = vmatpush1.msra.mxu0 0.0
        %1156 = vmatprep.subr.mxu0 0.0
        %1157 = vmatpush1.msra.mxu0 0.0
        %1158 = vmatprep.subr.mxu0 0.0
        %1159 = vmatpush1.msra.mxu0 0.0
        %1160 = vmatprep.subr.mxu0 0.0
        %1161 = vmatpush1.msra.mxu0 0.0
        %1162 = vmatprep.subr.mxu0 0.0
        %1163 = vmatpush1.msra.mxu0 0.0
        %1164 = vmatprep.subr.mxu0 0.0
        %1165 = vmatpush1.msra.mxu0 0.0
        %1166 = vmatprep.subr.mxu0 0.0
        %1167 = vmatpush1.msra.mxu0 0.0
        %1168 = vmatprep.subr.mxu0 0.0
        %1169 = vmatpush1.msra.mxu0 0.0
        %1170 = vmatprep.subr.mxu0 0.0
        %1171 = vmatpush1.msra.mxu0 0.0
        %1172 = vmatprep.subr.mxu0 0.0
        %1173 = vmatpush1.msra.mxu0 0.0
        %1174 = vmatprep.subr.mxu0 0.0
        %1175 = vmatpush1.msra.mxu0 0.0
        %1176 = vmatprep.subr.mxu0 0.0
        %1177 = vmatpush1.msra.mxu0 0.0
        %1178 = vmatprep.subr.mxu0 0.0
        %1179 = vmatpush1.msra.mxu0 0.0
        %1180 = vmatprep.subr.mxu0 0.0
        %1181 = vmatpush1.msra.mxu0 0.0
        %1182 = vmatprep.subr.mxu0 0.0
        %1183 = vmatpush1.msra.mxu0 0.0
        %1184 = vmatprep.subr.mxu0 0.0
        %1185 = vmatpush1.msra.mxu0 0.0
        %1186 = vmatprep.subr.mxu0 0.0
        %1187 = vmatpush1.msra.mxu0 0.0
        %1188 = vmatprep.subr.mxu0 0.0
        %1189 = vmatpush1.msra.mxu0 0.0
        %1190 = vmatprep.subr.mxu0 0.0
        %1191 = vmatpush1.msra.mxu0 0.0
        %1192 = vmatprep.subr.mxu0 0.0
        %1193 = vmatpush1.msra.mxu0 0.0
        %1194 = vmatprep.subr.mxu0 0.0
        %1195 = vmatpush1.msra.mxu0 0.0
        %1196 = vmatprep.subr.mxu0 0.0
        %1197 = vmatpush1.msra.mxu0 0.0
        %1198 = vmatprep.subr.mxu0 0.0
        %1199 = vmatpush1.msra.mxu0 0.0
        %1200 = vmatprep.subr.mxu0 0.0
        %1201 = vmatpush1.msra.mxu0 0.0
        %1202 = vmatprep.subr.mxu0 0.0
        %1203 = vmatpush1.msra.mxu0 0.0
        %1204 = vmatprep.subr.mxu0 0.0
        %1205 = vmatpush1.msra.mxu0 0.0
        %1206 = vmatprep.subr.mxu0 0.0
        %1207 = vmatpush1.msra.mxu0 0.0
        %1208 = vmatprep.mubr.f32.mxu0 0.0
        %1209 = vmatmul.mubr.f32.gmra.mrb[0].mxu0 %v660
        %v1210 = vpop.f32.mrb[0].mxu0
        %v1211 = vadd.f32 0.0, %v1210
        %v1212 = vpop.f32.mrb[0].mxu0
        %1213 = vdwg.mxu0
        %v1214 = vsel %vm581, %v1068, 0
        %1216 = vmatprep.subr.mxu0 0.0
        %1217 = vmatpush1.msra.mxu0 %v735
        %1218 = vmatprep.subr.mxu0 0.0
        %1219 = vmatpush1.msra.mxu0 0.0
        %1220 = vmatprep.subr.mxu0 0.0
        %1221 = vmatpush1.msra.mxu0 0.0
        %1222 = vmatprep.subr.mxu0 0.0
        %1223 = vmatpush1.msra.mxu0 0.0
        %1224 = vmatprep.subr.mxu0 0.0
        %1225 = vmatpush1.msra.mxu0 0.0
        %1226 = vmatprep.subr.mxu0 0.0
        %1227 = vmatpush1.msra.mxu0 0.0
        %1228 = vmatprep.subr.mxu0 0.0
        %1229 = vmatpush1.msra.mxu0 0.0
        %1230 = vmatprep.subr.mxu0 0.0
        %1231 = vmatpush1.msra.mxu0 0.0
        %1232 = vmatprep.subr.mxu0 0.0
        %1233 = vmatpush1.msra.mxu0 0.0
        %1234 = vmatprep.subr.mxu0 0.0
        %1235 = vmatpush1.msra.mxu0 0.0
        %1236 = vmatprep.subr.mxu0 0.0
        %1237 = vmatpush1.msra.mxu0 0.0
        %1238 = vmatprep.subr.mxu0 0.0
        %1239 = vmatpush1.msra.mxu0 0.0
        %1240 = vmatprep.subr.mxu0 0.0
        %1241 = vmatpush1.msra.mxu0 0.0
        %1242 = vmatprep.subr.mxu0 0.0
        %1243 = vmatpush1.msra.mxu0 0.0
        %1244 = vmatprep.subr.mxu0 0.0
        %1245 = vmatpush1.msra.mxu0 0.0
        %1246 = vmatprep.subr.mxu0 0.0
        %1247 = vmatpush1.msra.mxu0 0.0
        %1248 = vmatprep.subr.mxu0 0.0
        %1249 = vmatpush1.msra.mxu0 0.0
        %1250 = vmatprep.subr.mxu0 0.0
        %1251 = vmatpush1.msra.mxu0 0.0
        %1252 = vmatprep.subr.mxu0 0.0
        %1253 = vmatpush1.msra.mxu0 0.0
        %1254 = vmatprep.subr.mxu0 0.0
        %1255 = vmatpush1.msra.mxu0 0.0
        %1256 = vmatprep.subr.mxu0 0.0
        %1257 = vmatpush1.msra.mxu0 0.0
        %1258 = vmatprep.subr.mxu0 0.0
        %1259 = vmatpush1.msra.mxu0 0.0
        %1260 = vmatprep.subr.mxu0 0.0
        %1261 = vmatpush1.msra.mxu0 0.0
        %1262 = vmatprep.subr.mxu0 0.0
        %1263 = vmatpush1.msra.mxu0 0.0
        %1264 = vmatprep.subr.mxu0 0.0
        %1265 = vmatpush1.msra.mxu0 0.0
        %1266 = vmatprep.subr.mxu0 0.0
        %1267 = vmatpush1.msra.mxu0 0.0
        %1268 = vmatprep.subr.mxu0 0.0
        %1269 = vmatpush1.msra.mxu0 0.0
        %1270 = vmatprep.subr.mxu0 0.0
        %1271 = vmatpush1.msra.mxu0 0.0
        %1272 = vmatprep.subr.mxu0 0.0
        %1273 = vmatpush1.msra.mxu0 0.0
        %1274 = vmatprep.subr.mxu0 0.0
        %1275 = vmatpush1.msra.mxu0 0.0
        %1276 = vmatprep.subr.mxu0 0.0
        %1277 = vmatpush1.msra.mxu0 0.0
        %1278 = vmatprep.subr.mxu0 0.0
        %1279 = vmatpush1.msra.mxu0 0.0
        %1280 = vmatprep.mubr.f32.mxu0 0.0
        %1281 = vmatmul.mubr.f32.gmra.mrb[0].mxu0 %v1214
        %v1282 = vpop.f32.mrb[0].mxu0
        %v1283 = vadd.f32 0.0, %v1282
        %v1284 = vpop.f32.mrb[0].mxu0
        %1285 = vdwg.mxu0
        %1286 = vmatprep.subr.mxu0 0.0
        %1287 = vmatpush1.msra.mxu0 %v808
        %1288 = vmatprep.subr.mxu0 0.0
        %1289 = vmatpush1.msra.mxu0 0.0
        %1290 = vmatprep.subr.mxu0 0.0
        %1291 = vmatpush1.msra.mxu0 0.0
        %1292 = vmatprep.subr.mxu0 0.0
        %1293 = vmatpush1.msra.mxu0 0.0
        %1294 = vmatprep.subr.mxu0 0.0
        %1295 = vmatpush1.msra.mxu0 0.0
        %1296 = vmatprep.subr.mxu0 0.0
        %1297 = vmatpush1.msra.mxu0 0.0
        %1298 = vmatprep.subr.mxu0 0.0
        %1299 = vmatpush1.msra.mxu0 0.0
        %1300 = vmatprep.subr.mxu0 0.0
        %1301 = vmatpush1.msra.mxu0 0.0
        %1302 = vmatprep.subr.mxu0 0.0
        %1303 = vmatpush1.msra.mxu0 0.0
        %1304 = vmatprep.subr.mxu0 0.0
        %1305 = vmatpush1.msra.mxu0 0.0
        %1306 = vmatprep.subr.mxu0 0.0
        %1307 = vmatpush1.msra.mxu0 0.0
        %1308 = vmatprep.subr.mxu0 0.0
        %1309 = vmatpush1.msra.mxu0 0.0
        %1310 = vmatprep.subr.mxu0 0.0
        %1311 = vmatpush1.msra.mxu0 0.0
        %1312 = vmatprep.subr.mxu0 0.0
        %1313 = vmatpush1.msra.mxu0 0.0
        %1314 = vmatprep.subr.mxu0 0.0
        %1315 = vmatpush1.msra.mxu0 0.0
        %1316 = vmatprep.subr.mxu0 0.0
        %1317 = vmatpush1.msra.mxu0 0.0
        %1318 = vmatprep.subr.mxu0 0.0
        %1319 = vmatpush1.msra.mxu0 0.0
        %1320 = vmatprep.subr.mxu0 0.0
        %1321 = vmatpush1.msra.mxu0 0.0
        %1322 = vmatprep.subr.mxu0 0.0
        %1323 = vmatpush1.msra.mxu0 0.0
        %1324 = vmatprep.subr.mxu0 0.0
        %1325 = vmatpush1.msra.mxu0 0.0
        %1326 = vmatprep.subr.mxu0 0.0
        %1327 = vmatpush1.msra.mxu0 0.0
        %1328 = vmatprep.subr.mxu0 0.0
        %1329 = vmatpush1.msra.mxu0 0.0
        %1330 = vmatprep.subr.mxu0 0.0
        %1331 = vmatpush1.msra.mxu0 0.0
        %1332 = vmatprep.subr.mxu0 0.0
        %1333 = vmatpush1.msra.mxu0 0.0
        %1334 = vmatprep.subr.mxu0 0.0
        %1335 = vmatpush1.msra.mxu0 0.0
        %1336 = vmatprep.subr.mxu0 0.0
        %1337 = vmatpush1.msra.mxu0 0.0
        %1338 = vmatprep.subr.mxu0 0.0
        %1339 = vmatpush1.msra.mxu0 0.0
        %1340 = vmatprep.subr.mxu0 0.0
        %1341 = vmatpush1.msra.mxu0 0.0
        %1342 = vmatprep.subr.mxu0 0.0
        %1343 = vmatpush1.msra.mxu0 0.0
        %1344 = vmatprep.subr.mxu0 0.0
        %1345 = vmatpush1.msra.mxu0 0.0
        %1346 = vmatprep.subr.mxu0 0.0
        %1347 = vmatpush1.msra.mxu0 0.0
        %1348 = vmatprep.subr.mxu0 0.0
        %1349 = vmatpush1.msra.mxu0 0.0
        %1350 = vmatprep.mubr.f32.mxu0 0.0
        %1351 = vmatmul.mubr.f32.gmra.mrb[0].mxu0 %v1214
        %v1352 = vpop.f32.mrb[0].mxu0
        %v1353 = vadd.f32 0.0, %v1352
        %v1354 = vpop.f32.mrb[0].mxu0
        %1355 = vdwg.mxu0
        %v1356 = vsub.f32 %v1068, %v1283
        %v1357 = vmul.f32 %v1356, %v1356
        %v1358 = vsub.f32 %v1068, %v1353
        %v1359 = vmul.f32 %v1358, %v1358
        %v1360 = vadd.f32 %v1357, %v1359
        %v1361 = vsub.f32 %v1068, %v1141
        %v1362 = vmul.f32 %v1361, %v1361
        %v1363 = vadd.f32 %v1360, %v1362
        %v1364 = vsub.f32 %v1068, %v1211
        %v1365 = vmul.f32 %v1364, %v1364
        %v1366 = vadd.f32 %v1363, %v1365
        %v1367 = vadd.f32 %v891, %v1366
        %vm1368 = vcmask 27648
        %v1369 = vsel %vm1368, %v1367, 0.0
        %1370 = vadd.xlane.f32.xlu0 %v1369
        %v1371 = vpop.xlane.xlu0 %1370
        %v1372 = vrot.slane %v1371, 4
        %v1373 = vadd.f32 %v1371, %v1372
        %v1374 = vrot.slane %v1373, 2
        %v1375 = vadd.f32 %v1373, %v1374
        %v1376 = vrot.slane %v1375, 1
        %v1377 = vadd.f32 %v1375, %v1376
        %s1378 = vtos %v1377
        %v1379 = vstv %s1378
        %1380 = vst [vmem:[%s392] sm:$0x1] %v1379
        %p1381 = scmp.lt.s32.totalorder %s26, 1
        %s1382 = scalar_select %p1381, %s26, 1
        %s1383 = scalar_lea.vmem %s8, %s1382
        // Predicated region
        $region69: #{spatial_consistency_loss.1} parent=51 // pred_check
          %p1384 = pneg %p222
        $region70: #{spatial_consistency_loss.1} parent=51 // pred_check_branch
          %1386 = sbr.rel (%p1384) target = $region72
        $region71: #{spatial_consistency_loss.1} parent=51 // pred_region
          _
        $region72: #{spatial_consistency_loss.1} parent=51 // pred_fallthru
          _
      $region52: #{spatial_consistency_loss.1} parent=5 // pred_fallthru
        _
      %p1387 = scmp.le.s32.totalorder 2, %s21
      // Predicated region
      $region73: #{spatial_consistency_loss.1} parent=5 // pred_check
        %p1388 = pneg %p1387
      $region74: #{spatial_consistency_loss.1} parent=5 // pred_check_branch
        %1390 = sbr.rel (%p1388) target = $region76
      $region75: #{spatial_consistency_loss.1} parent=5 // pred_region
        %s1391 = ssub.s32 %s21, 2
        // Predicated region
        $region77: #{spatial_consistency_loss.1} parent=75 // pred_check
          %p1392 = pneg %p228
        $region78: #{spatial_consistency_loss.1} parent=75 // pred_check_branch
          %1394 = sbr.rel (%p1392) target = $region80
        $region79: #{spatial_consistency_loss.1} parent=75 // pred_region
          %p1395 = scmp.lt.s32.totalorder %s27, 1
          %s1396 = scalar_select %p1395, %s27, 1
          %s1397 = scalar_lea.vmem %s8, %s1396
        $region80: #{spatial_consistency_loss.1} parent=75 // pred_fallthru
          _
      $region76: #{spatial_consistency_loss.1} parent=5 // pred_fallthru
        _
    $region6: #{spatial_consistency_loss.1} parent=1 // loop_footer
      %s25 = sadd.s32 1, %s21
    $region7: #{spatial_consistency_loss.1} parent=1 // loop_footer_branch
      %20 = sbr.rel target = $region3
    $region8: #{spatial_consistency_loss.1} parent=1 // loop_exit
      _
    %1398 = vsyncpa [#allocation3], 1
    %s1399 = scalar_lea.sflag [#allocation3], 1
    %1400 = vsyncpa %s1399, 1
    %1401 = vsyncpa [#allocation5], 1
    %s1402 = scalar_lea.sflag [#allocation5], 1
    %1403 = vsyncpa %s1402, 1
    %1404 = vsyncpa [#allocation8], 1

</llo_original>
